<compile_context>
chip_gen: v7x
topology: tpu7x:2x2x1
jax: 0.10.0
libtpu: 0.0.40
codegen_flags: <defaults>
</compile_context>

<pallas_src>
import jax
import jax.numpy as jnp
from jax import lax
from jax.experimental import pallas as pl
from jax.experimental.pallas import tpu as pltpu


# ----------------------------- Pallas kernel ---------------------------------
def cnn_head_kernel(x_ref, w_ref, b_ref, o_ref):
    # x_ref : (TB, S*C)   flattened per-article sentence vectors
    # w_ref : (J, S*C)    host-folded (pool ∘ conv ∘ linear) weight, lane-major
    # b_ref : (1, J)      folded bias (conv_b @ lin_w + lin_b)
    # o_ref : (TB, J)     logits
    logits = lax.dot_general(
        x_ref[...], w_ref[...],
        dimension_numbers=(((1,), (1,)), ((), ())),   # contract S*C with S*C
        preferred_element_type=jnp.float32)
    o_ref[...] = (logits + b_ref[...]).astype(o_ref.dtype)


def _choose_batch_tile(B, tb_max=512):
    """Batch tile: as large as fits the VMEM budget; even/balanced grid for v7x."""
    if B <= tb_max:
        return B                                   # single block (== full dim, OK)
    nb = 2 * (-(-B // (2 * tb_max)))               # even number of grid steps
    tb = -(-B // nb)                               # balanced tile
    tb = ((tb + 7) // 8) * 8                       # sublane-aligned partial blocks
    return min(tb, tb_max)


def predict_cnn_head(news_vectors, conv_w_ock, conv_b, lin_w, lin_b):
    """news_vectors: (B, S, C) float32 -> logits (B, n_out) float32."""
    B, S, C = news_vectors.shape
    O, _, K = conv_w_ock.shape
    J = lin_w.shape[1]
    T = S - K + 1                                  # valid conv length (stride 1)
    assert T >= 1

    # ---- host-side algebraic fold (exact: no nonlinearity in the head) ------
    w_kcj = jnp.einsum('ock,oj->kcj', conv_w_ock, lin_w)          # (K, C, J)
    V = jnp.zeros((S, C, J), jnp.float32)
    for k in range(K):                                            # pool the taps
        V = V.at[k:k + T].add(w_kcj[k])
    V = V * (1.0 / T)                                             # fold mean scale
    w_mat = V.reshape(S * C, J).T                                 # (J, S*C) lane-major
    b_fold = (conv_b @ lin_w + lin_b).reshape(1, J)

    x2d = news_vectors.reshape(B, S * C)                          # contiguous, free

    # ---- tiling / VMEM budget ------------------------------------------------
    TB = _choose_batch_tile(B)
    nb = pl.cdiv(B, TB)
    block_bytes = TB * S * C * x2d.dtype.itemsize
    vmem_limit = max(2 * block_bytes + (4 << 20), 32 << 20)       # raise v5e default
    vmem_limit = min(vmem_limit, 64 << 20)                        # v7x physical cap

    flops = int(2 * B * S * C * J + 2 * B * J)
    bytes_accessed = int(x2d.size * x2d.dtype.itemsize
                         + w_mat.size * w_mat.dtype.itemsize
                         + b_fold.size * b_fold.dtype.itemsize
                         + B * J * 4)

    grid_spec = pltpu.PrefetchScalarGridSpec(
        num_scalar_prefetch=0,
        grid=(nb,),
        in_specs=[
            pl.BlockSpec((TB, S * C), lambda i: (i, 0)),          # batch-tiled stream
            pl.BlockSpec((J, S * C), lambda i: (0, 0)),           # resident folded weight
            pl.BlockSpec((1, J), lambda i: (0, 0)),               # resident folded bias
        ],
        out_specs=pl.BlockSpec((TB, J), lambda i: (i, 0)),
    )

    return pl.pallas_call(
        cnn_head_kernel,
        out_shape=jax.ShapeDtypeStruct((B, J), jnp.float32),
        grid_spec=grid_spec,
        compiler_params=pltpu.CompilerParams(
            dimension_semantics=("parallel",),
            vmem_limit_bytes=int(vmem_limit)),
        cost_estimate=pl.CostEstimate(flops=flops, transcendentals=0,
                                      bytes_accessed=bytes_accessed),
    )(x2d, w_mat, b_fold)


# ------------------------- plain-JAX glue / reference ------------------------
def bert_surrogate(input_ids, attention_mask, emb_table):
    """Deterministic stand-in for BertModel(...).last_hidden_state[:, 0]."""
    emb = emb_table[input_ids]                                    # (N, L, C)
    m = attention_mask[..., None].astype(emb.dtype)
    return (emb * m).sum(axis=1) / jnp.maximum(m.sum(axis=1), 1.0)    # (N, C)


def reference_head(news_vectors, conv_w_ock, conv_b, lin_w, lin_b):
    """Pure-JAX mirror of the PyTorch post-BERT forward (for verification)."""
    x = jnp.transpose(news_vectors, (0, 2, 1))                    # (B, C, S) NCL
    y = lax.conv_general_dilated(
        x, conv_w_ock, window_strides=(1,), padding='VALID',
        dimension_numbers=('NCH', 'OIH', 'NCH'))                  # (B, O, T)
    y = y + conv_b[None, :, None]
    y = jnp.transpose(y, (0, 2, 1))                               # (B, T, O)
    pooled = jnp.mean(y, axis=1)                                  # (B, O)
    return pooled @ lin_w + lin_b                                 # (B, 2)


# ----------------------------------- main -------------------------------------
if __name__ == "__main__":
    B, S, L = 2, 8, 16          # batch, seq_len (num sentences), sentence_len
    VOCAB, C, O, K = 100, 768, 300, 3

    key = jax.random.PRNGKey(0)
    k_ids, k_mask, k_emb, k_cw, k_cb, k_lw, k_lb = jax.random.split(key, 7)

    input_ids = jax.random.randint(k_ids, (B, S, L), 0, VOCAB, dtype=jnp.int32)
    attention_mask = (jax.random.uniform(k_mask, (B, S, L)) > 0.1).astype(jnp.int32)

    emb_table = 0.02 * jax.random.normal(k_emb, (VOCAB, C), jnp.float32)
    conv_w_ock = 0.02 * jax.random.normal(k_cw, (O, C, K), jnp.float32)   # torch layout
    conv_b = 0.02 * jax.random.normal(k_cb, (O,), jnp.float32)
    lin_w = 0.02 * jax.random.normal(k_lw, (O, 2), jnp.float32)           # (300, 2)
    lin_b = 0.02 * jax.random.normal(k_lb, (2,), jnp.float32)

    # (B, S, L) -> (B*S, L), encode, take per-sentence vector, back to (B, S, C).
    ids_flat = input_ids.reshape(B * S, L)
    mask_flat = attention_mask.reshape(B * S, L)
    news_vectors = bert_surrogate(ids_flat, mask_flat, emb_table).reshape(B, S, C)

    logits = predict_cnn_head(news_vectors, conv_w_ock, conv_b, lin_w, lin_b)
    logits = jax.block_until_ready(logits)

    ref = reference_head(news_vectors, conv_w_ock, conv_b, lin_w, lin_b)
    assert logits.shape == (B, 2)
    assert jnp.allclose(logits, ref, rtol=1e-4, atol=1e-4), (logits, ref)

    print("KERNEL_OK")
</pallas_src>

<mosaic_0001>
module attributes {stable_mosaic.version = 11 : i64} {
  func.func @cnn_head_kernel(%arg0: i32, %arg1: memref<2x6144xf32, #tpu.memory_space<vmem>>, %arg2: memref<2x6144xf32, #tpu.memory_space<vmem>>, %arg3: memref<1x2xf32, #tpu.memory_space<vmem>>, %arg4: memref<2x2xf32, #tpu.memory_space<vmem>>) attributes {dimension_semantics = [#tpu.dimension_semantics<parallel>], iteration_bounds = array<i64: 1>, scalar_prefetch = 0 : i64, scratch_operands = 0 : i64, tpu.core_type = #tpu.core_type<tc>, window_params = [{transform_indices = @transform_0, window_bounds = array<i64: 2, 6144>}, {pipeline_mode = #tpu.pipeline_mode<synchronous>, transform_indices = @transform_1, window_bounds = array<i64: 2, 6144>}, {pipeline_mode = #tpu.pipeline_mode<synchronous>, transform_indices = @transform_2, window_bounds = array<i64: 1, 2>}, {transform_indices = @transform_3, window_bounds = array<i64: 2, 2>}]} {
    %c0 = arith.constant 0 : index
    %c0_0 = arith.constant 0 : index
    %0 = vector.load %arg1[%c0, %c0_0] : memref<2x6144xf32, #tpu.memory_space<vmem>>, vector<2x6144xf32>
    %c0_1 = arith.constant 0 : index
    %c0_2 = arith.constant 0 : index
    %1 = vector.load %arg2[%c0_1, %c0_2] : memref<2x6144xf32, #tpu.memory_space<vmem>>, vector<2x6144xf32>
    %cst = arith.constant dense<0.000000e+00> : vector<2x2xf32>
    %2 = tpu.matmul %0, %1, %cst {dimension_numbers = #tpu.dot_dimension_numbers<[1], [1], [0], [0], [0, 0, 1, 0], [], []>} : vector<2x6144xf32>, vector<2x6144xf32>, vector<2x2xf32> -> vector<2x2xf32>
    %c0_3 = arith.constant 0 : index
    %c0_4 = arith.constant 0 : index
    %3 = vector.load %arg3[%c0_3, %c0_4] : memref<1x2xf32, #tpu.memory_space<vmem>>, vector<1x2xf32>
    %4 = vector.broadcast %3 : vector<1x2xf32> to vector<2x2xf32>
    %5 = arith.addf %2, %4 : vector<2x2xf32>
    %c0_5 = arith.constant 0 : index
    %c0_6 = arith.constant 0 : index
    %6 = vector.load %arg4[%c0_5, %c0_6] : memref<2x2xf32, #tpu.memory_space<vmem>>, vector<2x2xf32>
    tpu.vector_store %arg4[%c0_5, %c0_6], %5 {strides = array<i32>} : memref<2x2xf32, #tpu.memory_space<vmem>>, vector<2x2xf32>,
    return
  }
  func.func @transform_0(%arg0: i32) -> (i32, i32) {
    %c0_i32 = arith.constant 0 : i32
    %c0_i32_0 = arith.constant 0 : i32
    return %arg0, %c0_i32 : i32, i32
  }
  func.func @transform_1(%arg0: i32) -> (i32, i32) {
    %c0_i32 = arith.constant 0 : i32
    %c0_i32_0 = arith.constant 0 : i32
    %c0_i32_1 = arith.constant 0 : i32
    return %c0_i32, %c0_i32_0 : i32, i32
  }
  func.func @transform_2(%arg0: i32) -> (i32, i32) {
    %c0_i32 = arith.constant 0 : i32
    %c0_i32_0 = arith.constant 0 : i32
    %c0_i32_1 = arith.constant 0 : i32
    return %c0_i32, %c0_i32_0 : i32, i32
  }
  func.func @transform_3(%arg0: i32) -> (i32, i32) {
    %c0_i32 = arith.constant 0 : i32
    %c0_i32_0 = arith.constant 0 : i32
    return %arg0, %c0_i32 : i32, i32
  }
}

</mosaic_0001>

<llo_original>
// kernel: tpu_custom_call.1
$region0: #{tpu_custom_call.1}
  #allocation0 [shape = 'u32[]', space=smem, size = 0x4, offset = 0x4, fixed_abs, tag = 'smem constant byte address 0x4 - core index']
  #allocation1 [shape = 'u32[144,128]{1,0:T(1,128)}', space=vmem, size = 0x12000, scoped, tag = 'internal scratch']
  %s0 = inlined_call_operand.hbm [shape: f32[2,6144], index: 0, kind: input, shape index: {}]
  %s1 = inlined_call_operand.hbm [shape: f32[2,6144], index: 1, kind: input, shape index: {}]
  %s2 = inlined_call_operand.vmem [shape: f32[1,2], index: 2, kind: input, shape index: {}]
  %s3 = inlined_call_operand.hbm [shape: f32[2,2], index: 3, kind: output, shape index: {}]
  %s4 = sld [smem:[#allocation0]]
  $region30: #{tpu_custom_call.1} parent=0
    _
  %s6 = ssub.s32 1, %s4
  %s7 = scalar_select 0, %s6, %s4
  $region1: #{tpu_custom_call.1} parent=0
    #allocation2 [shape = 'u8[49152]{0}', space=vmem, size = 0xc000, scoped, tag = 'input window, operand 0, single buffered']
    #allocation3 [shape = 's32[1]{0}', space=sflag, size = 0x4, scoped, tag = 'scoped memory for tpu_custom_call.1']
    #allocation4 [shape = 's32[1]{0}', space=sflag, size = 0x4, scoped, tag = 'scoped memory for tpu_custom_call.1']
    #allocation5 [shape = 'u8[49152]{0}', space=vmem, size = 0xc000, scoped, tag = 'input window, operand 1, single buffered']
    #allocation6 [shape = 's32[1]{0}', space=sflag, size = 0x4, scoped, tag = 'scoped memory for tpu_custom_call.1']
    #allocation7 [shape = 'u8[1024]{0}', space=vmem, size = 0x400, scoped, tag = 'output window, operand 0, single buffered']
    %8 = vsyncpa [#allocation3], 0
    %9 = vsyncpa [#allocation6], 0
    %10 = vsyncpa [#allocation4], 0
    // Predicated region
    $region2: #{tpu_custom_call.1} parent=1 // pred_check
      _
    $region3: #{tpu_custom_call.1} parent=1 // pred_check_branch
      %12 = sbr.rel (0) target = $region5
    $region4: #{tpu_custom_call.1} parent=1 // pred_region
      %s14 = ssub.s32 1536, 1536
      %15 = vsyncadd [#allocation3], %s14
      %s17 = sshll.u32 [#allocation2], 4
      %s18 = int_to_ptr.vmem [resolvable:$true] %s17
      %20 = dma.hbm_to_vmem [thread:$0]  %s0, 1536, %s18, [#allocation3]
    $region5: #{tpu_custom_call.1} parent=1 // pred_fallthru
      _
    // Predicated region
    $region6: #{tpu_custom_call.1} parent=1 // pred_check
      _
    $region7: #{tpu_custom_call.1} parent=1 // pred_check_branch
      %22 = sbr.rel (0) target = $region9
    $region8: #{tpu_custom_call.1} parent=1 // pred_region
      %s24 = ssub.s32 1536, 1536
      %25 = vsyncadd [#allocation6], %s24
      %s27 = sshll.u32 [#allocation5], 4
      %s28 = int_to_ptr.vmem [resolvable:$true] %s27
      %30 = dma.hbm_to_vmem [thread:$0]  %s1, 1536, %s28, [#allocation6]
    $region9: #{tpu_custom_call.1} parent=1 // pred_fallthru
      _
    // Predicated region
    $region10: #{tpu_custom_call.1} parent=1 // pred_check
      _
    $region11: #{tpu_custom_call.1} parent=1 // pred_check_branch
      %32 = sbr.rel (0) target = $region13
    $region12: #{tpu_custom_call.1} parent=1 // pred_region
      _
    $region13: #{tpu_custom_call.1} parent=1 // pred_fallthru
      _
    // Predicated region
    $region14: #{tpu_custom_call.1} parent=1 // pred_check
      _
    $region15: #{tpu_custom_call.1} parent=1 // pred_check_branch
      %34 = sbr.rel (0) target = $region17
    $region16: #{tpu_custom_call.1} parent=1 // pred_region
      %35 = dma.done [#allocation3], 1536
    $region17: #{tpu_custom_call.1} parent=1 // pred_fallthru
      _
    // Predicated region
    $region18: #{tpu_custom_call.1} parent=1 // pred_check
      _
    $region19: #{tpu_custom_call.1} parent=1 // pred_check_branch
      %37 = sbr.rel (0) target = $region21
    $region20: #{tpu_custom_call.1} parent=1 // pred_region
      %38 = dma.done [#allocation6], 1536
    $region21: #{tpu_custom_call.1} parent=1 // pred_fallthru
      _
    %v39 = vld [vmem:[#allocation2] sm:$0xff]
    %v40 = vld [vmem:[#allocation2 + $0x8] sm:$0xff]
    %v41 = vld [vmem:[#allocation2 + $0x10] sm:$0xff]
    %v42 = vld [vmem:[#allocation2 + $0x18] sm:$0xff]
    %v43 = vld [vmem:[#allocation2 + $0x20] sm:$0xff]
    %v44 = vld [vmem:[#allocation2 + $0x28] sm:$0xff]
    %v45 = vld [vmem:[#allocation2 + $0x30] sm:$0xff]
    %v46 = vld [vmem:[#allocation2 + $0x38] sm:$0xff]
    %v47 = vld [vmem:[#allocation2 + $0x40] sm:$0xff]
    %v48 = vld [vmem:[#allocation2 + $0x48] sm:$0xff]
    %v49 = vld [vmem:[#allocation2 + $0x50] sm:$0xff]
    %v50 = vld [vmem:[#allocation2 + $0x58] sm:$0xff]
    %v51 = vld [vmem:[#allocation5] sm:$0xff]
    %v52 = vld [vmem:[#allocation5 + $0x8] sm:$0xff]
    %v53 = vld [vmem:[#allocation5 + $0x10] sm:$0xff]
    %v54 = vld [vmem:[#allocation5 + $0x18] sm:$0xff]
    %v55 = vld [vmem:[#allocation5 + $0x20] sm:$0xff]
    %v56 = vld [vmem:[#allocation5 + $0x28] sm:$0xff]
    %v57 = vld [vmem:[#allocation5 + $0x30] sm:$0xff]
    %v58 = vld [vmem:[#allocation5 + $0x38] sm:$0xff]
    %v59 = vld [vmem:[#allocation5 + $0x40] sm:$0xff]
    %v60 = vld [vmem:[#allocation5 + $0x48] sm:$0xff]
    %v61 = vld [vmem:[#allocation5 + $0x50] sm:$0xff]
    %v62 = vld [vmem:[#allocation5 + $0x58] sm:$0xff]
    %v63 = vld [vmem:[%s2] sm:$0x1]
    %v65 = vlaneseq
    %v66 = vshrl.u32 %v65, 7
    %v67 = vsub.s32 0, %v66
    %v68 = vrot.slane %v63, %v67
    %v82 = vcombine.high %v39, %v39
    %v84 = vunpack.c.l.s4 1983009808
    %v85 = vunpack.c.0.s8 %v84
    %v86 = vlaneseq
    %v87 = vshrl.u32 %v86, 7
    %v88 = vsub.s32 %v85, %v87
    %v89 = vrot.slane %v39, %v88
    %v91 = vunpack.c.l.s4 1983009808
    %v92 = vunpack.c.0.s8 %v91
    %v93 = vlaneseq
    %v94 = vshrl.u32 %v93, 7
    %v95 = vsub.s32 %v92, %v94
    %v96 = vrot.slane %v82, %v95
    %v97 = vcombine.high %v89, %v89
    %v98 = vcombine.high %v96, %v96
    %v99 = vcombine.high %v40, %v40
    %v101 = vunpack.c.l.s4 1983009808
    %v102 = vunpack.c.0.s8 %v101
    %v103 = vlaneseq
    %v104 = vshrl.u32 %v103, 7
    %v105 = vsub.s32 %v102, %v104
    %v106 = vrot.slane %v40, %v105
    %v108 = vunpack.c.l.s4 1983009808
    %v109 = vunpack.c.0.s8 %v108
    %v110 = vlaneseq
    %v111 = vshrl.u32 %v110, 7
    %v112 = vsub.s32 %v109, %v111
    %v113 = vrot.slane %v99, %v112
    %v114 = vcombine.high %v106, %v106
    %v115 = vcombine.high %v113, %v113
    %v116 = vcombine.high %v41, %v41
    %v118 = vunpack.c.l.s4 1983009808
    %v119 = vunpack.c.0.s8 %v118
    %v120 = vlaneseq
    %v121 = vshrl.u32 %v120, 7
    %v122 = vsub.s32 %v119, %v121
    %v123 = vrot.slane %v41, %v122
    %v125 = vunpack.c.l.s4 1983009808
    %v126 = vunpack.c.0.s8 %v125
    %v127 = vlaneseq
    %v128 = vshrl.u32 %v127, 7
    %v129 = vsub.s32 %v126, %v128
    %v130 = vrot.slane %v116, %v129
    %v131 = vcombine.high %v123, %v123
    %v132 = vcombine.high %v130, %v130
    %v133 = vcombine.high %v42, %v42
    %v135 = vunpack.c.l.s4 1983009808
    %v136 = vunpack.c.0.s8 %v135
    %v137 = vlaneseq
    %v138 = vshrl.u32 %v137, 7
    %v139 = vsub.s32 %v136, %v138
    %v140 = vrot.slane %v42, %v139
    %v142 = vunpack.c.l.s4 1983009808
    %v143 = vunpack.c.0.s8 %v142
    %v144 = vlaneseq
    %v145 = vshrl.u32 %v144, 7
    %v146 = vsub.s32 %v143, %v145
    %v147 = vrot.slane %v133, %v146
    %v148 = vcombine.high %v140, %v140
    %v149 = vcombine.high %v147, %v147
    %v150 = vcombine.high %v43, %v43
    %v152 = vunpack.c.l.s4 1983009808
    %v153 = vunpack.c.0.s8 %v152
    %v154 = vlaneseq
    %v155 = vshrl.u32 %v154, 7
    %v156 = vsub.s32 %v153, %v155
    %v157 = vrot.slane %v43, %v156
    %v159 = vunpack.c.l.s4 1983009808
    %v160 = vunpack.c.0.s8 %v159
    %v161 = vlaneseq
    %v162 = vshrl.u32 %v161, 7
    %v163 = vsub.s32 %v160, %v162
    %v164 = vrot.slane %v150, %v163
    %v165 = vcombine.high %v157, %v157
    %v166 = vcombine.high %v164, %v164
    %v167 = vcombine.high %v44, %v44
    %v169 = vunpack.c.l.s4 1983009808
    %v170 = vunpack.c.0.s8 %v169
    %v171 = vlaneseq
    %v172 = vshrl.u32 %v171, 7
    %v173 = vsub.s32 %v170, %v172
    %v174 = vrot.slane %v44, %v173
    %v176 = vunpack.c.l.s4 1983009808
    %v177 = vunpack.c.0.s8 %v176
    %v178 = vlaneseq
    %v179 = vshrl.u32 %v178, 7
    %v180 = vsub.s32 %v177, %v179
    %v181 = vrot.slane %v167, %v180
    %v182 = vcombine.high %v174, %v174
    %v183 = vcombine.high %v181, %v181
    %v184 = vcombine.high %v45, %v45
    %v186 = vunpack.c.l.s4 1983009808
    %v187 = vunpack.c.0.s8 %v186
    %v188 = vlaneseq
    %v189 = vshrl.u32 %v188, 7
    %v190 = vsub.s32 %v187, %v189
    %v191 = vrot.slane %v45, %v190
    %v193 = vunpack.c.l.s4 1983009808
    %v194 = vunpack.c.0.s8 %v193
    %v195 = vlaneseq
    %v196 = vshrl.u32 %v195, 7
    %v197 = vsub.s32 %v194, %v196
    %v198 = vrot.slane %v184, %v197
    %v199 = vcombine.high %v191, %v191
    %v200 = vcombine.high %v198, %v198
    %v201 = vcombine.high %v46, %v46
    %v203 = vunpack.c.l.s4 1983009808
    %v204 = vunpack.c.0.s8 %v203
    %v205 = vlaneseq
    %v206 = vshrl.u32 %v205, 7
    %v207 = vsub.s32 %v204, %v206
    %v208 = vrot.slane %v46, %v207
    %v210 = vunpack.c.l.s4 1983009808
    %v211 = vunpack.c.0.s8 %v210
    %v212 = vlaneseq
    %v213 = vshrl.u32 %v212, 7
    %v214 = vsub.s32 %v211, %v213
    %v215 = vrot.slane %v201, %v214
    %v216 = vcombine.high %v208, %v208
    %v217 = vcombine.high %v215, %v215
    %v218 = vcombine.high %v47, %v47
    %v220 = vunpack.c.l.s4 1983009808
    %v221 = vunpack.c.0.s8 %v220
    %v222 = vlaneseq
    %v223 = vshrl.u32 %v222, 7
    %v224 = vsub.s32 %v221, %v223
    %v225 = vrot.slane %v47, %v224
    %v227 = vunpack.c.l.s4 1983009808
    %v228 = vunpack.c.0.s8 %v227
    %v229 = vlaneseq
    %v230 = vshrl.u32 %v229, 7
    %v231 = vsub.s32 %v228, %v230
    %v232 = vrot.slane %v218, %v231
    %v233 = vcombine.high %v225, %v225
    %v234 = vcombine.high %v232, %v232
    %v235 = vcombine.high %v48, %v48
    %v237 = vunpack.c.l.s4 1983009808
    %v238 = vunpack.c.0.s8 %v237
    %v239 = vlaneseq
    %v240 = vshrl.u32 %v239, 7
    %v241 = vsub.s32 %v238, %v240
    %v242 = vrot.slane %v48, %v241
    %v244 = vunpack.c.l.s4 1983009808
    %v245 = vunpack.c.0.s8 %v244
    %v246 = vlaneseq
    %v247 = vshrl.u32 %v246, 7
    %v248 = vsub.s32 %v245, %v247
    %v249 = vrot.slane %v235, %v248
    %v250 = vcombine.high %v242, %v242
    %v251 = vcombine.high %v249, %v249
    %v252 = vcombine.high %v49, %v49
    %v254 = vunpack.c.l.s4 1983009808
    %v255 = vunpack.c.0.s8 %v254
    %v256 = vlaneseq
    %v257 = vshrl.u32 %v256, 7
    %v258 = vsub.s32 %v255, %v257
    %v259 = vrot.slane %v49, %v258
    %v261 = vunpack.c.l.s4 1983009808
    %v262 = vunpack.c.0.s8 %v261
    %v263 = vlaneseq
    %v264 = vshrl.u32 %v263, 7
    %v265 = vsub.s32 %v262, %v264
    %v266 = vrot.slane %v252, %v265
    %v267 = vcombine.high %v259, %v259
    %v268 = vcombine.high %v266, %v266
    %v269 = vcombine.high %v50, %v50
    %v271 = vunpack.c.l.s4 1983009808
    %v272 = vunpack.c.0.s8 %v271
    %v273 = vlaneseq
    %v274 = vshrl.u32 %v273, 7
    %v275 = vsub.s32 %v272, %v274
    %v276 = vrot.slane %v50, %v275
    %v278 = vunpack.c.l.s4 1983009808
    %v279 = vunpack.c.0.s8 %v278
    %v280 = vlaneseq
    %v281 = vshrl.u32 %v280, 7
    %v282 = vsub.s32 %v279, %v281
    %v283 = vrot.slane %v269, %v282
    %v284 = vcombine.high %v276, %v276
    %v285 = vcombine.high %v283, %v283
    %v346 = vcombine.high %v51, %v51
    %v348 = vunpack.c.l.s4 1983009808
    %v349 = vunpack.c.0.s8 %v348
    %v350 = vlaneseq
    %v351 = vshrl.u32 %v350, 7
    %v352 = vsub.s32 %v349, %v351
    %v353 = vrot.slane %v51, %v352
    %v355 = vunpack.c.l.s4 1983009808
    %v356 = vunpack.c.0.s8 %v355
    %v357 = vlaneseq
    %v358 = vshrl.u32 %v357, 7
    %v359 = vsub.s32 %v356, %v358
    %v360 = vrot.slane %v346, %v359
    %v361 = vcombine.high %v353, %v353
    %v362 = vcombine.high %v360, %v360
    %v363 = vcombine.high %v52, %v52
    %v365 = vunpack.c.l.s4 1983009808
    %v366 = vunpack.c.0.s8 %v365
    %v367 = vlaneseq
    %v368 = vshrl.u32 %v367, 7
    %v369 = vsub.s32 %v366, %v368
    %v370 = vrot.slane %v52, %v369
    %v372 = vunpack.c.l.s4 1983009808
    %v373 = vunpack.c.0.s8 %v372
    %v374 = vlaneseq
    %v375 = vshrl.u32 %v374, 7
    %v376 = vsub.s32 %v373, %v375
    %v377 = vrot.slane %v363, %v376
    %v378 = vcombine.high %v370, %v370
    %v379 = vcombine.high %v377, %v377
    %v380 = vcombine.high %v53, %v53
    %v382 = vunpack.c.l.s4 1983009808
    %v383 = vunpack.c.0.s8 %v382
    %v384 = vlaneseq
    %v385 = vshrl.u32 %v384, 7
    %v386 = vsub.s32 %v383, %v385
    %v387 = vrot.slane %v53, %v386
    %v389 = vunpack.c.l.s4 1983009808
    %v390 = vunpack.c.0.s8 %v389
    %v391 = vlaneseq
    %v392 = vshrl.u32 %v391, 7
    %v393 = vsub.s32 %v390, %v392
    %v394 = vrot.slane %v380, %v393
    %v395 = vcombine.high %v387, %v387
    %v396 = vcombine.high %v394, %v394
    %v397 = vcombine.high %v54, %v54
    %v399 = vunpack.c.l.s4 1983009808
    %v400 = vunpack.c.0.s8 %v399
    %v401 = vlaneseq
    %v402 = vshrl.u32 %v401, 7
    %v403 = vsub.s32 %v400, %v402
    %v404 = vrot.slane %v54, %v403
    %v406 = vunpack.c.l.s4 1983009808
    %v407 = vunpack.c.0.s8 %v406
    %v408 = vlaneseq
    %v409 = vshrl.u32 %v408, 7
    %v410 = vsub.s32 %v407, %v409
    %v411 = vrot.slane %v397, %v410
    %v412 = vcombine.high %v404, %v404
    %v413 = vcombine.high %v411, %v411
    %v414 = vcombine.high %v55, %v55
    %v416 = vunpack.c.l.s4 1983009808
    %v417 = vunpack.c.0.s8 %v416
    %v418 = vlaneseq
    %v419 = vshrl.u32 %v418, 7
    %v420 = vsub.s32 %v417, %v419
    %v421 = vrot.slane %v55, %v420
    %v423 = vunpack.c.l.s4 1983009808
    %v424 = vunpack.c.0.s8 %v423
    %v425 = vlaneseq
    %v426 = vshrl.u32 %v425, 7
    %v427 = vsub.s32 %v424, %v426
    %v428 = vrot.slane %v414, %v427
    %v429 = vcombine.high %v421, %v421
    %v430 = vcombine.high %v428, %v428
    %v431 = vcombine.high %v56, %v56
    %v433 = vunpack.c.l.s4 1983009808
    %v434 = vunpack.c.0.s8 %v433
    %v435 = vlaneseq
    %v436 = vshrl.u32 %v435, 7
    %v437 = vsub.s32 %v434, %v436
    %v438 = vrot.slane %v56, %v437
    %v440 = vunpack.c.l.s4 1983009808
    %v441 = vunpack.c.0.s8 %v440
    %v442 = vlaneseq
    %v443 = vshrl.u32 %v442, 7
    %v444 = vsub.s32 %v441, %v443
    %v445 = vrot.slane %v431, %v444
    %v446 = vcombine.high %v438, %v438
    %v447 = vcombine.high %v445, %v445
    %v448 = vcombine.high %v57, %v57
    %v450 = vunpack.c.l.s4 1983009808
    %v451 = vunpack.c.0.s8 %v450
    %v452 = vlaneseq
    %v453 = vshrl.u32 %v452, 7
    %v454 = vsub.s32 %v451, %v453
    %v455 = vrot.slane %v57, %v454
    %v457 = vunpack.c.l.s4 1983009808
    %v458 = vunpack.c.0.s8 %v457
    %v459 = vlaneseq
    %v460 = vshrl.u32 %v459, 7
    %v461 = vsub.s32 %v458, %v460
    %v462 = vrot.slane %v448, %v461
    %v463 = vcombine.high %v455, %v455
    %v464 = vcombine.high %v462, %v462
    %v465 = vcombine.high %v58, %v58
    %v467 = vunpack.c.l.s4 1983009808
    %v468 = vunpack.c.0.s8 %v467
    %v469 = vlaneseq
    %v470 = vshrl.u32 %v469, 7
    %v471 = vsub.s32 %v468, %v470
    %v472 = vrot.slane %v58, %v471
    %v474 = vunpack.c.l.s4 1983009808
    %v475 = vunpack.c.0.s8 %v474
    %v476 = vlaneseq
    %v477 = vshrl.u32 %v476, 7
    %v478 = vsub.s32 %v475, %v477
    %v479 = vrot.slane %v465, %v478
    %v480 = vcombine.high %v472, %v472
    %v481 = vcombine.high %v479, %v479
    %v482 = vcombine.high %v59, %v59
    %v484 = vunpack.c.l.s4 1983009808
    %v485 = vunpack.c.0.s8 %v484
    %v486 = vlaneseq
    %v487 = vshrl.u32 %v486, 7
    %v488 = vsub.s32 %v485, %v487
    %v489 = vrot.slane %v59, %v488
    %v491 = vunpack.c.l.s4 1983009808
    %v492 = vunpack.c.0.s8 %v491
    %v493 = vlaneseq
    %v494 = vshrl.u32 %v493, 7
    %v495 = vsub.s32 %v492, %v494
    %v496 = vrot.slane %v482, %v495
    %v497 = vcombine.high %v489, %v489
    %v498 = vcombine.high %v496, %v496
    %v499 = vcombine.high %v60, %v60
    %v501 = vunpack.c.l.s4 1983009808
    %v502 = vunpack.c.0.s8 %v501
    %v503 = vlaneseq
    %v504 = vshrl.u32 %v503, 7
    %v505 = vsub.s32 %v502, %v504
    %v506 = vrot.slane %v60, %v505
    %v508 = vunpack.c.l.s4 1983009808
    %v509 = vunpack.c.0.s8 %v508
    %v510 = vlaneseq
    %v511 = vshrl.u32 %v510, 7
    %v512 = vsub.s32 %v509, %v511
    %v513 = vrot.slane %v499, %v512
    %v514 = vcombine.high %v506, %v506
    %v515 = vcombine.high %v513, %v513
    %v516 = vcombine.high %v61, %v61
    %v518 = vunpack.c.l.s4 1983009808
    %v519 = vunpack.c.0.s8 %v518
    %v520 = vlaneseq
    %v521 = vshrl.u32 %v520, 7
    %v522 = vsub.s32 %v519, %v521
    %v523 = vrot.slane %v61, %v522
    %v525 = vunpack.c.l.s4 1983009808
    %v526 = vunpack.c.0.s8 %v525
    %v527 = vlaneseq
    %v528 = vshrl.u32 %v527, 7
    %v529 = vsub.s32 %v526, %v528
    %v530 = vrot.slane %v516, %v529
    %v531 = vcombine.high %v523, %v523
    %v532 = vcombine.high %v530, %v530
    %v533 = vcombine.high %v62, %v62
    %v535 = vunpack.c.l.s4 1983009808
    %v536 = vunpack.c.0.s8 %v535
    %v537 = vlaneseq
    %v538 = vshrl.u32 %v537, 7
    %v539 = vsub.s32 %v536, %v538
    %v540 = vrot.slane %v62, %v539
    %v542 = vunpack.c.l.s4 1983009808
    %v543 = vunpack.c.0.s8 %v542
    %v544 = vlaneseq
    %v545 = vshrl.u32 %v544, 7
    %v546 = vsub.s32 %v543, %v545
    %v547 = vrot.slane %v533, %v546
    %v548 = vcombine.high %v540, %v540
    %v549 = vcombine.high %v547, %v547
    %598 = vmatprep.subr.mxu0 %v361
    %599 = vmatpush1.xpose.msra.mxu0 %v353
    %600 = vmatprep.subr.mxu0 0.0
    %601 = vmatpush1.xpose.msra.mxu0 0.0
    %602 = vmatprep.subr.mxu0 0.0
    %603 = vmatpush1.xpose.msra.mxu0 0.0
    %604 = vmatprep.subr.mxu0 0.0
    %605 = vmatpush1.xpose.msra.mxu0 0.0
    %606 = vmatprep.subr.mxu0 0.0
    %607 = vmatpush1.xpose.msra.mxu0 0.0
    %608 = vmatprep.subr.mxu0 0.0
    %609 = vmatpush1.xpose.msra.mxu0 0.0
    %610 = vmatprep.subr.mxu0 0.0
    %611 = vmatpush1.xpose.msra.mxu0 0.0
    %612 = vmatprep.subr.mxu0 0.0
    %613 = vmatpush1.xpose.msra.mxu0 0.0
    %614 = vmatprep.subr.mxu0 0.0
    %615 = vmatpush1.xpose.msra.mxu0 0.0
    %616 = vmatprep.subr.mxu0 0.0
    %617 = vmatpush1.xpose.msra.mxu0 0.0
    %618 = vmatprep.subr.mxu0 0.0
    %619 = vmatpush1.xpose.msra.mxu0 0.0
    %620 = vmatprep.subr.mxu0 0.0
    %621 = vmatpush1.xpose.msra.mxu0 0.0
    %622 = vmatprep.subr.mxu0 0.0
    %623 = vmatpush1.xpose.msra.mxu0 0.0
    %624 = vmatprep.subr.mxu0 0.0
    %625 = vmatpush1.xpose.msra.mxu0 0.0
    %626 = vmatprep.subr.mxu0 0.0
    %627 = vmatpush1.xpose.msra.mxu0 0.0
    %628 = vmatprep.subr.mxu0 0.0
    %629 = vmatpush1.xpose.msra.mxu0 0.0
    %630 = vmatprep.subr.mxu0 0.0
    %631 = vmatpush1.xpose.msra.mxu0 0.0
    %632 = vmatprep.subr.mxu0 0.0
    %633 = vmatpush1.xpose.msra.mxu0 0.0
    %634 = vmatprep.subr.mxu0 0.0
    %635 = vmatpush1.xpose.msra.mxu0 0.0
    %636 = vmatprep.subr.mxu0 0.0
    %637 = vmatpush1.xpose.msra.mxu0 0.0
    %638 = vmatprep.subr.mxu0 0.0
    %639 = vmatpush1.xpose.msra.mxu0 0.0
    %640 = vmatprep.subr.mxu0 0.0
    %641 = vmatpush1.xpose.msra.mxu0 0.0
    %642 = vmatprep.subr.mxu0 0.0
    %643 = vmatpush1.xpose.msra.mxu0 0.0
    %644 = vmatprep.subr.mxu0 0.0
    %645 = vmatpush1.xpose.msra.mxu0 0.0
    %646 = vmatprep.subr.mxu0 0.0
    %647 = vmatpush1.xpose.msra.mxu0 0.0
    %648 = vmatprep.subr.mxu0 0.0
    %649 = vmatpush1.xpose.msra.mxu0 0.0
    %650 = vmatprep.subr.mxu0 0.0
    %651 = vmatpush1.xpose.msra.mxu0 0.0
    %652 = vmatprep.subr.mxu0 0.0
    %653 = vmatpush1.xpose.msra.mxu0 0.0
    %654 = vmatprep.subr.mxu0 0.0
    %655 = vmatpush1.xpose.msra.mxu0 0.0
    %656 = vmatprep.subr.mxu0 0.0
    %657 = vmatpush1.xpose.msra.mxu0 0.0
    %658 = vmatprep.subr.mxu0 0.0
    %659 = vmatpush1.xpose.msra.mxu0 0.0
    %660 = vmatprep.subr.mxu0 0.0
    %661 = vmatpush1.xpose.msra.mxu0 0.0
    %662 = vmatprep.mubr.f32.mxu0 %v97
    %663 = vmatmul.mubr.f32.gmra.mrb[0].mxu0 %v89
    %v664 = vpop.f32.mrb[0].mxu0
    %v665 = vadd.f32 %v68, %v664
    %v666 = vpop.f32.mrb[0].mxu0
    %667 = vdwg.mxu0
    %668 = vmatprep.subr.mxu0 %v362
    %669 = vmatpush1.xpose.msra.mxu0 %v360
    %670 = vmatprep.subr.mxu0 0.0
    %671 = vmatpush1.xpose.msra.mxu0 0.0
    %672 = vmatprep.subr.mxu0 0.0
    %673 = vmatpush1.xpose.msra.mxu0 0.0
    %674 = vmatprep.subr.mxu0 0.0
    %675 = vmatpush1.xpose.msra.mxu0 0.0
    %676 = vmatprep.subr.mxu0 0.0
    %677 = vmatpush1.xpose.msra.mxu0 0.0
    %678 = vmatprep.subr.mxu0 0.0
    %679 = vmatpush1.xpose.msra.mxu0 0.0
    %680 = vmatprep.subr.mxu0 0.0
    %681 = vmatpush1.xpose.msra.mxu0 0.0
    %682 = vmatprep.subr.mxu0 0.0
    %683 = vmatpush1.xpose.msra.mxu0 0.0
    %684 = vmatprep.subr.mxu0 0.0
    %685 = vmatpush1.xpose.msra.mxu0 0.0
    %686 = vmatprep.subr.mxu0 0.0
    %687 = vmatpush1.xpose.msra.mxu0 0.0
    %688 = vmatprep.subr.mxu0 0.0
    %689 = vmatpush1.xpose.msra.mxu0 0.0
    %690 = vmatprep.subr.mxu0 0.0
    %691 = vmatpush1.xpose.msra.mxu0 0.0
    %692 = vmatprep.subr.mxu0 0.0
    %693 = vmatpush1.xpose.msra.mxu0 0.0
    %694 = vmatprep.subr.mxu0 0.0
    %695 = vmatpush1.xpose.msra.mxu0 0.0
    %696 = vmatprep.subr.mxu0 0.0
    %697 = vmatpush1.xpose.msra.mxu0 0.0
    %698 = vmatprep.subr.mxu0 0.0
    %699 = vmatpush1.xpose.msra.mxu0 0.0
    %700 = vmatprep.subr.mxu0 0.0
    %701 = vmatpush1.xpose.msra.mxu0 0.0
    %702 = vmatprep.subr.mxu0 0.0
    %703 = vmatpush1.xpose.msra.mxu0 0.0
    %704 = vmatprep.subr.mxu0 0.0
    %705 = vmatpush1.xpose.msra.mxu0 0.0
    %706 = vmatprep.subr.mxu0 0.0
    %707 = vmatpush1.xpose.msra.mxu0 0.0
    %708 = vmatprep.subr.mxu0 0.0
    %709 = vmatpush1.xpose.msra.mxu0 0.0
    %710 = vmatprep.subr.mxu0 0.0
    %711 = vmatpush1.xpose.msra.mxu0 0.0
    %712 = vmatprep.subr.mxu0 0.0
    %713 = vmatpush1.xpose.msra.mxu0 0.0
    %714 = vmatprep.subr.mxu0 0.0
    %715 = vmatpush1.xpose.msra.mxu0 0.0
    %716 = vmatprep.subr.mxu0 0.0
    %717 = vmatpush1.xpose.msra.mxu0 0.0
    %718 = vmatprep.subr.mxu0 0.0
    %719 = vmatpush1.xpose.msra.mxu0 0.0
    %720 = vmatprep.subr.mxu0 0.0
    %721 = vmatpush1.xpose.msra.mxu0 0.0
    %722 = vmatprep.subr.mxu0 0.0
    %723 = vmatpush1.xpose.msra.mxu0 0.0
    %724 = vmatprep.subr.mxu0 0.0
    %725 = vmatpush1.xpose.msra.mxu0 0.0
    %726 = vmatprep.subr.mxu0 0.0
    %727 = vmatpush1.xpose.msra.mxu0 0.0
    %728 = vmatprep.subr.mxu0 0.0
    %729 = vmatpush1.xpose.msra.mxu0 0.0
    %730 = vmatprep.subr.mxu0 0.0
    %731 = vmatpush1.xpose.msra.mxu0 0.0
    %732 = vmatprep.mubr.f32.mxu0 %v98
    %733 = vmatmul.mubr.f32.gmra.mrb[0].mxu0 %v96
    %v734 = vpop.f32.mrb[0].mxu0
    %v735 = vadd.f32 %v665, %v734
    %v736 = vpop.f32.mrb[0].mxu0
    %737 = vdwg.mxu0
    %738 = vmatprep.subr.mxu0 %v378
    %739 = vmatpush1.xpose.msra.mxu0 %v370
    %740 = vmatprep.subr.mxu0 0.0
    %741 = vmatpush1.xpose.msra.mxu0 0.0
    %742 = vmatprep.subr.mxu0 0.0
    %743 = vmatpush1.xpose.msra.mxu0 0.0
    %744 = vmatprep.subr.mxu0 0.0
    %745 = vmatpush1.xpose.msra.mxu0 0.0
    %746 = vmatprep.subr.mxu0 0.0
    %747 = vmatpush1.xpose.msra.mxu0 0.0
    %748 = vmatprep.subr.mxu0 0.0
    %749 = vmatpush1.xpose.msra.mxu0 0.0
    %750 = vmatprep.subr.mxu0 0.0
    %751 = vmatpush1.xpose.msra.mxu0 0.0
    %752 = vmatprep.subr.mxu0 0.0
    %753 = vmatpush1.xpose.msra.mxu0 0.0
    %754 = vmatprep.subr.mxu0 0.0
    %755 = vmatpush1.xpose.msra.mxu0 0.0
    %756 = vmatprep.subr.mxu0 0.0
    %757 = vmatpush1.xpose.msra.mxu0 0.0
    %758 = vmatprep.subr.mxu0 0.0
    %759 = vmatpush1.xpose.msra.mxu0 0.0
    %760 = vmatprep.subr.mxu0 0.0
    %761 = vmatpush1.xpose.msra.mxu0 0.0
    %762 = vmatprep.subr.mxu0 0.0
    %763 = vmatpush1.xpose.msra.mxu0 0.0
    %764 = vmatprep.subr.mxu0 0.0
    %765 = vmatpush1.xpose.msra.mxu0 0.0
    %766 = vmatprep.subr.mxu0 0.0
    %767 = vmatpush1.xpose.msra.mxu0 0.0
    %768 = vmatprep.subr.mxu0 0.0
    %769 = vmatpush1.xpose.msra.mxu0 0.0
    %770 = vmatprep.subr.mxu0 0.0
    %771 = vmatpush1.xpose.msra.mxu0 0.0
    %772 = vmatprep.subr.mxu0 0.0
    %773 = vmatpush1.xpose.msra.mxu0 0.0
    %774 = vmatprep.subr.mxu0 0.0
    %775 = vmatpush1.xpose.msra.mxu0 0.0
    %776 = vmatprep.subr.mxu0 0.0
    %777 = vmatpush1.xpose.msra.mxu0 0.0
    %778 = vmatprep.subr.mxu0 0.0
    %779 = vmatpush1.xpose.msra.mxu0 0.0
    %780 = vmatprep.subr.mxu0 0.0
    %781 = vmatpush1.xpose.msra.mxu0 0.0
    %782 = vmatprep.subr.mxu0 0.0
    %783 = vmatpush1.xpose.msra.mxu0 0.0
    %784 = vmatprep.subr.mxu0 0.0
    %785 = vmatpush1.xpose.msra.mxu0 0.0
    %786 = vmatprep.subr.mxu0 0.0
    %787 = vmatpush1.xpose.msra.mxu0 0.0
    %788 = vmatprep.subr.mxu0 0.0
    %789 = vmatpush1.xpose.msra.mxu0 0.0
    %790 = vmatprep.subr.mxu0 0.0
    %791 = vmatpush1.xpose.msra.mxu0 0.0
    %792 = vmatprep.subr.mxu0 0.0
    %793 = vmatpush1.xpose.msra.mxu0 0.0
    %794 = vmatprep.subr.mxu0 0.0
    %795 = vmatpush1.xpose.msra.mxu0 0.0
    %796 = vmatprep.subr.mxu0 0.0
    %797 = vmatpush1.xpose.msra.mxu0 0.0
    %798 = vmatprep.subr.mxu0 0.0
    %799 = vmatpush1.xpose.msra.mxu0 0.0
    %800 = vmatprep.subr.mxu0 0.0
    %801 = vmatpush1.xpose.msra.mxu0 0.0
    %802 = vmatprep.mubr.f32.mxu0 %v114
    %803 = vmatmul.mubr.f32.gmra.mrb[0].mxu0 %v106
    %v804 = vpop.f32.mrb[0].mxu0
    %v805 = vadd.f32 %v735, %v804
    %v806 = vpop.f32.mrb[0].mxu0
    %807 = vdwg.mxu0
    %808 = vmatprep.subr.mxu0 %v379
    %809 = vmatpush1.xpose.msra.mxu0 %v377
    %810 = vmatprep.subr.mxu0 0.0
    %811 = vmatpush1.xpose.msra.mxu0 0.0
    %812 = vmatprep.subr.mxu0 0.0
    %813 = vmatpush1.xpose.msra.mxu0 0.0
    %814 = vmatprep.subr.mxu0 0.0
    %815 = vmatpush1.xpose.msra.mxu0 0.0
    %816 = vmatprep.subr.mxu0 0.0
    %817 = vmatpush1.xpose.msra.mxu0 0.0
    %818 = vmatprep.subr.mxu0 0.0
    %819 = vmatpush1.xpose.msra.mxu0 0.0
    %820 = vmatprep.subr.mxu0 0.0
    %821 = vmatpush1.xpose.msra.mxu0 0.0
    %822 = vmatprep.subr.mxu0 0.0
    %823 = vmatpush1.xpose.msra.mxu0 0.0
    %824 = vmatprep.subr.mxu0 0.0
    %825 = vmatpush1.xpose.msra.mxu0 0.0
    %826 = vmatprep.subr.mxu0 0.0
    %827 = vmatpush1.xpose.msra.mxu0 0.0
    %828 = vmatprep.subr.mxu0 0.0
    %829 = vmatpush1.xpose.msra.mxu0 0.0
    %830 = vmatprep.subr.mxu0 0.0
    %831 = vmatpush1.xpose.msra.mxu0 0.0
    %832 = vmatprep.subr.mxu0 0.0
    %833 = vmatpush1.xpose.msra.mxu0 0.0
    %834 = vmatprep.subr.mxu0 0.0
    %835 = vmatpush1.xpose.msra.mxu0 0.0
    %836 = vmatprep.subr.mxu0 0.0
    %837 = vmatpush1.xpose.msra.mxu0 0.0
    %838 = vmatprep.subr.mxu0 0.0
    %839 = vmatpush1.xpose.msra.mxu0 0.0
    %840 = vmatprep.subr.mxu0 0.0
    %841 = vmatpush1.xpose.msra.mxu0 0.0
    %842 = vmatprep.subr.mxu0 0.0
    %843 = vmatpush1.xpose.msra.mxu0 0.0
    %844 = vmatprep.subr.mxu0 0.0
    %845 = vmatpush1.xpose.msra.mxu0 0.0
    %846 = vmatprep.subr.mxu0 0.0
    %847 = vmatpush1.xpose.msra.mxu0 0.0
    %848 = vmatprep.subr.mxu0 0.0
    %849 = vmatpush1.xpose.msra.mxu0 0.0
    %850 = vmatprep.subr.mxu0 0.0
    %851 = vmatpush1.xpose.msra.mxu0 0.0
    %852 = vmatprep.subr.mxu0 0.0
    %853 = vmatpush1.xpose.msra.mxu0 0.0
    %854 = vmatprep.subr.mxu0 0.0
    %855 = vmatpush1.xpose.msra.mxu0 0.0
    %856 = vmatprep.subr.mxu0 0.0
    %857 = vmatpush1.xpose.msra.mxu0 0.0
    %858 = vmatprep.subr.mxu0 0.0
    %859 = vmatpush1.xpose.msra.mxu0 0.0
    %860 = vmatprep.subr.mxu0 0.0
    %861 = vmatpush1.xpose.msra.mxu0 0.0
    %862 = vmatprep.subr.mxu0 0.0
    %863 = vmatpush1.xpose.msra.mxu0 0.0
    %864 = vmatprep.subr.mxu0 0.0
    %865 = vmatpush1.xpose.msra.mxu0 0.0
    %866 = vmatprep.subr.mxu0 0.0
    %867 = vmatpush1.xpose.msra.mxu0 0.0
    %868 = vmatprep.subr.mxu0 0.0
    %869 = vmatpush1.xpose.msra.mxu0 0.0
    %870 = vmatprep.subr.mxu0 0.0
    %871 = vmatpush1.xpose.msra.mxu0 0.0
    %872 = vmatprep.mubr.f32.mxu0 %v115
    %873 = vmatmul.mubr.f32.gmra.mrb[0].mxu0 %v113
    %v874 = vpop.f32.mrb[0].mxu0
    %v875 = vadd.f32 %v805, %v874
    %v876 = vpop.f32.mrb[0].mxu0
    %877 = vdwg.mxu0
    %878 = vmatprep.subr.mxu0 %v395
    %879 = vmatpush1.xpose.msra.mxu0 %v387
    %880 = vmatprep.subr.mxu0 0.0
    %881 = vmatpush1.xpose.msra.mxu0 0.0
    %882 = vmatprep.subr.mxu0 0.0
    %883 = vmatpush1.xpose.msra.mxu0 0.0
    %884 = vmatprep.subr.mxu0 0.0
    %885 = vmatpush1.xpose.msra.mxu0 0.0
    %886 = vmatprep.subr.mxu0 0.0
    %887 = vmatpush1.xpose.msra.mxu0 0.0
    %888 = vmatprep.subr.mxu0 0.0
    %889 = vmatpush1.xpose.msra.mxu0 0.0
    %890 = vmatprep.subr.mxu0 0.0
    %891 = vmatpush1.xpose.msra.mxu0 0.0
    %892 = vmatprep.subr.mxu0 0.0
    %893 = vmatpush1.xpose.msra.mxu0 0.0
    %894 = vmatprep.subr.mxu0 0.0
    %895 = vmatpush1.xpose.msra.mxu0 0.0
    %896 = vmatprep.subr.mxu0 0.0
    %897 = vmatpush1.xpose.msra.mxu0 0.0
    %898 = vmatprep.subr.mxu0 0.0
    %899 = vmatpush1.xpose.msra.mxu0 0.0
    %900 = vmatprep.subr.mxu0 0.0
    %901 = vmatpush1.xpose.msra.mxu0 0.0
    %902 = vmatprep.subr.mxu0 0.0
    %903 = vmatpush1.xpose.msra.mxu0 0.0
    %904 = vmatprep.subr.mxu0 0.0
    %905 = vmatpush1.xpose.msra.mxu0 0.0
    %906 = vmatprep.subr.mxu0 0.0
    %907 = vmatpush1.xpose.msra.mxu0 0.0
    %908 = vmatprep.subr.mxu0 0.0
    %909 = vmatpush1.xpose.msra.mxu0 0.0
    %910 = vmatprep.subr.mxu0 0.0
    %911 = vmatpush1.xpose.msra.mxu0 0.0
    %912 = vmatprep.subr.mxu0 0.0
    %913 = vmatpush1.xpose.msra.mxu0 0.0
    %914 = vmatprep.subr.mxu0 0.0
    %915 = vmatpush1.xpose.msra.mxu0 0.0
    %916 = vmatprep.subr.mxu0 0.0
    %917 = vmatpush1.xpose.msra.mxu0 0.0
    %918 = vmatprep.subr.mxu0 0.0
    %919 = vmatpush1.xpose.msra.mxu0 0.0
    %920 = vmatprep.subr.mxu0 0.0
    %921 = vmatpush1.xpose.msra.mxu0 0.0
    %922 = vmatprep.subr.mxu0 0.0
    %923 = vmatpush1.xpose.msra.mxu0 0.0
    %924 = vmatprep.subr.mxu0 0.0
    %925 = vmatpush1.xpose.msra.mxu0 0.0
    %926 = vmatprep.subr.mxu0 0.0
    %927 = vmatpush1.xpose.msra.mxu0 0.0
    %928 = vmatprep.subr.mxu0 0.0
    %929 = vmatpush1.xpose.msra.mxu0 0.0
    %930 = vmatprep.subr.mxu0 0.0
    %931 = vmatpush1.xpose.msra.mxu0 0.0
    %932 = vmatprep.subr.mxu0 0.0
    %933 = vmatpush1.xpose.msra.mxu0 0.0
    %934 = vmatprep.subr.mxu0 0.0
    %935 = vmatpush1.xpose.msra.mxu0 0.0
    %936 = vmatprep.subr.mxu0 0.0
    %937 = vmatpush1.xpose.msra.mxu0 0.0
    %938 = vmatprep.subr.mxu0 0.0
    %939 = vmatpush1.xpose.msra.mxu0 0.0
    %940 = vmatprep.subr.mxu0 0.0
    %941 = vmatpush1.xpose.msra.mxu0 0.0
    %942 = vmatprep.mubr.f32.mxu0 %v131
    %943 = vmatmul.mubr.f32.gmra.mrb[0].mxu0 %v123
    %v944 = vpop.f32.mrb[0].mxu0
    %v945 = vadd.f32 %v875, %v944
    %v946 = vpop.f32.mrb[0].mxu0
    %947 = vdwg.mxu0
    %948 = vmatprep.subr.mxu0 %v396
    %949 = vmatpush1.xpose.msra.mxu0 %v394
    %950 = vmatprep.subr.mxu0 0.0
    %951 = vmatpush1.xpose.msra.mxu0 0.0
    %952 = vmatprep.subr.mxu0 0.0
    %953 = vmatpush1.xpose.msra.mxu0 0.0
    %954 = vmatprep.subr.mxu0 0.0
    %955 = vmatpush1.xpose.msra.mxu0 0.0
    %956 = vmatprep.subr.mxu0 0.0
    %957 = vmatpush1.xpose.msra.mxu0 0.0
    %958 = vmatprep.subr.mxu0 0.0
    %959 = vmatpush1.xpose.msra.mxu0 0.0
    %960 = vmatprep.subr.mxu0 0.0
    %961 = vmatpush1.xpose.msra.mxu0 0.0
    %962 = vmatprep.subr.mxu0 0.0
    %963 = vmatpush1.xpose.msra.mxu0 0.0
    %964 = vmatprep.subr.mxu0 0.0
    %965 = vmatpush1.xpose.msra.mxu0 0.0
    %966 = vmatprep.subr.mxu0 0.0
    %967 = vmatpush1.xpose.msra.mxu0 0.0
    %968 = vmatprep.subr.mxu0 0.0
    %969 = vmatpush1.xpose.msra.mxu0 0.0
    %970 = vmatprep.subr.mxu0 0.0
    %971 = vmatpush1.xpose.msra.mxu0 0.0
    %972 = vmatprep.subr.mxu0 0.0
    %973 = vmatpush1.xpose.msra.mxu0 0.0
    %974 = vmatprep.subr.mxu0 0.0
    %975 = vmatpush1.xpose.msra.mxu0 0.0
    %976 = vmatprep.subr.mxu0 0.0
    %977 = vmatpush1.xpose.msra.mxu0 0.0
    %978 = vmatprep.subr.mxu0 0.0
    %979 = vmatpush1.xpose.msra.mxu0 0.0
    %980 = vmatprep.subr.mxu0 0.0
    %981 = vmatpush1.xpose.msra.mxu0 0.0
    %982 = vmatprep.subr.mxu0 0.0
    %983 = vmatpush1.xpose.msra.mxu0 0.0
    %984 = vmatprep.subr.mxu0 0.0
    %985 = vmatpush1.xpose.msra.mxu0 0.0
    %986 = vmatprep.subr.mxu0 0.0
    %987 = vmatpush1.xpose.msra.mxu0 0.0
    %988 = vmatprep.subr.mxu0 0.0
    %989 = vmatpush1.xpose.msra.mxu0 0.0
    %990 = vmatprep.subr.mxu0 0.0
    %991 = vmatpush1.xpose.msra.mxu0 0.0
    %992 = vmatprep.subr.mxu0 0.0
    %993 = vmatpush1.xpose.msra.mxu0 0.0
    %994 = vmatprep.subr.mxu0 0.0
    %995 = vmatpush1.xpose.msra.mxu0 0.0
    %996 = vmatprep.subr.mxu0 0.0
    %997 = vmatpush1.xpose.msra.mxu0 0.0
    %998 = vmatprep.subr.mxu0 0.0
    %999 = vmatpush1.xpose.msra.mxu0 0.0
    %1000 = vmatprep.subr.mxu0 0.0
    %1001 = vmatpush1.xpose.msra.mxu0 0.0
    %1002 = vmatprep.subr.mxu0 0.0
    %1003 = vmatpush1.xpose.msra.mxu0 0.0
    %1004 = vmatprep.subr.mxu0 0.0
    %1005 = vmatpush1.xpose.msra.mxu0 0.0
    %1006 = vmatprep.subr.mxu0 0.0
    %1007 = vmatpush1.xpose.msra.mxu0 0.0
    %1008 = vmatprep.subr.mxu0 0.0
    %1009 = vmatpush1.xpose.msra.mxu0 0.0
    %1010 = vmatprep.subr.mxu0 0.0
    %1011 = vmatpush1.xpose.msra.mxu0 0.0
    %1012 = vmatprep.mubr.f32.mxu0 %v132
    %1013 = vmatmul.mubr.f32.gmra.mrb[0].mxu0 %v130
    %v1014 = vpop.f32.mrb[0].mxu0
    %v1015 = vadd.f32 %v945, %v1014
    %v1016 = vpop.f32.mrb[0].mxu0
    %1017 = vdwg.mxu0
    %1018 = vmatprep.subr.mxu0 %v412
    %1019 = vmatpush1.xpose.msra.mxu0 %v404
    %1020 = vmatprep.subr.mxu0 0.0
    %1021 = vmatpush1.xpose.msra.mxu0 0.0
    %1022 = vmatprep.subr.mxu0 0.0
    %1023 = vmatpush1.xpose.msra.mxu0 0.0
    %1024 = vmatprep.subr.mxu0 0.0
    %1025 = vmatpush1.xpose.msra.mxu0 0.0
    %1026 = vmatprep.subr.mxu0 0.0
    %1027 = vmatpush1.xpose.msra.mxu0 0.0
    %1028 = vmatprep.subr.mxu0 0.0
    %1029 = vmatpush1.xpose.msra.mxu0 0.0
    %1030 = vmatprep.subr.mxu0 0.0
    %1031 = vmatpush1.xpose.msra.mxu0 0.0
    %1032 = vmatprep.subr.mxu0 0.0
    %1033 = vmatpush1.xpose.msra.mxu0 0.0
    %1034 = vmatprep.subr.mxu0 0.0
    %1035 = vmatpush1.xpose.msra.mxu0 0.0
    %1036 = vmatprep.subr.mxu0 0.0
    %1037 = vmatpush1.xpose.msra.mxu0 0.0
    %1038 = vmatprep.subr.mxu0 0.0
    %1039 = vmatpush1.xpose.msra.mxu0 0.0
    %1040 = vmatprep.subr.mxu0 0.0
    %1041 = vmatpush1.xpose.msra.mxu0 0.0
    %1042 = vmatprep.subr.mxu0 0.0
    %1043 = vmatpush1.xpose.msra.mxu0 0.0
    %1044 = vmatprep.subr.mxu0 0.0
    %1045 = vmatpush1.xpose.msra.mxu0 0.0
    %1046 = vmatprep.subr.mxu0 0.0
    %1047 = vmatpush1.xpose.msra.mxu0 0.0
    %1048 = vmatprep.subr.mxu0 0.0
    %1049 = vmatpush1.xpose.msra.mxu0 0.0
    %1050 = vmatprep.subr.mxu0 0.0
    %1051 = vmatpush1.xpose.msra.mxu0 0.0
    %1052 = vmatprep.subr.mxu0 0.0
    %1053 = vmatpush1.xpose.msra.mxu0 0.0
    %1054 = vmatprep.subr.mxu0 0.0
    %1055 = vmatpush1.xpose.msra.mxu0 0.0
    %1056 = vmatprep.subr.mxu0 0.0
    %1057 = vmatpush1.xpose.msra.mxu0 0.0
    %1058 = vmatprep.subr.mxu0 0.0
    %1059 = vmatpush1.xpose.msra.mxu0 0.0
    %1060 = vmatprep.subr.mxu0 0.0
    %1061 = vmatpush1.xpose.msra.mxu0 0.0
    %1062 = vmatprep.subr.mxu0 0.0
    %1063 = vmatpush1.xpose.msra.mxu0 0.0
    %1064 = vmatprep.subr.mxu0 0.0
    %1065 = vmatpush1.xpose.msra.mxu0 0.0
    %1066 = vmatprep.subr.mxu0 0.0
    %1067 = vmatpush1.xpose.msra.mxu0 0.0
    %1068 = vmatprep.subr.mxu0 0.0
    %1069 = vmatpush1.xpose.msra.mxu0 0.0
    %1070 = vmatprep.subr.mxu0 0.0
    %1071 = vmatpush1.xpose.msra.mxu0 0.0
    %1072 = vmatprep.subr.mxu0 0.0
    %1073 = vmatpush1.xpose.msra.mxu0 0.0
    %1074 = vmatprep.subr.mxu0 0.0
    %1075 = vmatpush1.xpose.msra.mxu0 0.0
    %1076 = vmatprep.subr.mxu0 0.0
    %1077 = vmatpush1.xpose.msra.mxu0 0.0
    %1078 = vmatprep.subr.mxu0 0.0
    %1079 = vmatpush1.xpose.msra.mxu0 0.0
    %1080 = vmatprep.subr.mxu0 0.0
    %1081 = vmatpush1.xpose.msra.mxu0 0.0
    %1082 = vmatprep.mubr.f32.mxu0 %v148
    %1083 = vmatmul.mubr.f32.gmra.mrb[0].mxu0 %v140
    %v1084 = vpop.f32.mrb[0].mxu0
    %v1085 = vadd.f32 %v1015, %v1084
    %v1086 = vpop.f32.mrb[0].mxu0
    %1087 = vdwg.mxu0
    %1088 = vmatprep.subr.mxu0 %v413
    %1089 = vmatpush1.xpose.msra.mxu0 %v411
    %1090 = vmatprep.subr.mxu0 0.0
    %1091 = vmatpush1.xpose.msra.mxu0 0.0
    %1092 = vmatprep.subr.mxu0 0.0
    %1093 = vmatpush1.xpose.msra.mxu0 0.0
    %1094 = vmatprep.subr.mxu0 0.0
    %1095 = vmatpush1.xpose.msra.mxu0 0.0
    %1096 = vmatprep.subr.mxu0 0.0
    %1097 = vmatpush1.xpose.msra.mxu0 0.0
    %1098 = vmatprep.subr.mxu0 0.0
    %1099 = vmatpush1.xpose.msra.mxu0 0.0
    %1100 = vmatprep.subr.mxu0 0.0
    %1101 = vmatpush1.xpose.msra.mxu0 0.0
    %1102 = vmatprep.subr.mxu0 0.0
    %1103 = vmatpush1.xpose.msra.mxu0 0.0
    %1104 = vmatprep.subr.mxu0 0.0
    %1105 = vmatpush1.xpose.msra.mxu0 0.0
    %1106 = vmatprep.subr.mxu0 0.0
    %1107 = vmatpush1.xpose.msra.mxu0 0.0
    %1108 = vmatprep.subr.mxu0 0.0
    %1109 = vmatpush1.xpose.msra.mxu0 0.0
    %1110 = vmatprep.subr.mxu0 0.0
    %1111 = vmatpush1.xpose.msra.mxu0 0.0
    %1112 = vmatprep.subr.mxu0 0.0
    %1113 = vmatpush1.xpose.msra.mxu0 0.0
    %1114 = vmatprep.subr.mxu0 0.0
    %1115 = vmatpush1.xpose.msra.mxu0 0.0
    %1116 = vmatprep.subr.mxu0 0.0
    %1117 = vmatpush1.xpose.msra.mxu0 0.0
    %1118 = vmatprep.subr.mxu0 0.0
    %1119 = vmatpush1.xpose.msra.mxu0 0.0
    %1120 = vmatprep.subr.mxu0 0.0
    %1121 = vmatpush1.xpose.msra.mxu0 0.0
    %1122 = vmatprep.subr.mxu0 0.0
    %1123 = vmatpush1.xpose.msra.mxu0 0.0
    %1124 = vmatprep.subr.mxu0 0.0
    %1125 = vmatpush1.xpose.msra.mxu0 0.0
    %1126 = vmatprep.subr.mxu0 0.0
    %1127 = vmatpush1.xpose.msra.mxu0 0.0
    %1128 = vmatprep.subr.mxu0 0.0
    %1129 = vmatpush1.xpose.msra.mxu0 0.0
    %1130 = vmatprep.subr.mxu0 0.0
    %1131 = vmatpush1.xpose.msra.mxu0 0.0
    %1132 = vmatprep.subr.mxu0 0.0
    %1133 = vmatpush1.xpose.msra.mxu0 0.0
    %1134 = vmatprep.subr.mxu0 0.0
    %1135 = vmatpush1.xpose.msra.mxu0 0.0
    %1136 = vmatprep.subr.mxu0 0.0
    %1137 = vmatpush1.xpose.msra.mxu0 0.0
    %1138 = vmatprep.subr.mxu0 0.0
    %1139 = vmatpush1.xpose.msra.mxu0 0.0
    %1140 = vmatprep.subr.mxu0 0.0
    %1141 = vmatpush1.xpose.msra.mxu0 0.0
    %1142 = vmatprep.subr.mxu0 0.0
    %1143 = vmatpush1.xpose.msra.mxu0 0.0
    %1144 = vmatprep.subr.mxu0 0.0
    %1145 = vmatpush1.xpose.msra.mxu0 0.0
    %1146 = vmatprep.subr.mxu0 0.0
    %1147 = vmatpush1.xpose.msra.mxu0 0.0
    %1148 = vmatprep.subr.mxu0 0.0
    %1149 = vmatpush1.xpose.msra.mxu0 0.0
    %1150 = vmatprep.subr.mxu0 0.0
    %1151 = vmatpush1.xpose.msra.mxu0 0.0
    %1152 = vmatprep.mubr.f32.mxu0 %v149
    %1153 = vmatmul.mubr.f32.gmra.mrb[0].mxu0 %v147
    %v1154 = vpop.f32.mrb[0].mxu0
    %v1155 = vadd.f32 %v1085, %v1154
    %v1156 = vpop.f32.mrb[0].mxu0
    %1157 = vdwg.mxu0
    %1158 = vmatprep.subr.mxu0 %v429
    %1159 = vmatpush1.xpose.msra.mxu0 %v421
    %1160 = vmatprep.subr.mxu0 0.0
    %1161 = vmatpush1.xpose.msra.mxu0 0.0
    %1162 = vmatprep.subr.mxu0 0.0
    %1163 = vmatpush1.xpose.msra.mxu0 0.0
    %1164 = vmatprep.subr.mxu0 0.0
    %1165 = vmatpush1.xpose.msra.mxu0 0.0
    %1166 = vmatprep.subr.mxu0 0.0
    %1167 = vmatpush1.xpose.msra.mxu0 0.0
    %1168 = vmatprep.subr.mxu0 0.0
    %1169 = vmatpush1.xpose.msra.mxu0 0.0
    %1170 = vmatprep.subr.mxu0 0.0
    %1171 = vmatpush1.xpose.msra.mxu0 0.0
    %1172 = vmatprep.subr.mxu0 0.0
    %1173 = vmatpush1.xpose.msra.mxu0 0.0
    %1174 = vmatprep.subr.mxu0 0.0
    %1175 = vmatpush1.xpose.msra.mxu0 0.0
    %1176 = vmatprep.subr.mxu0 0.0
    %1177 = vmatpush1.xpose.msra.mxu0 0.0
    %1178 = vmatprep.subr.mxu0 0.0
    %1179 = vmatpush1.xpose.msra.mxu0 0.0
    %1180 = vmatprep.subr.mxu0 0.0
    %1181 = vmatpush1.xpose.msra.mxu0 0.0
    %1182 = vmatprep.subr.mxu0 0.0
    %1183 = vmatpush1.xpose.msra.mxu0 0.0
    %1184 = vmatprep.subr.mxu0 0.0
    %1185 = vmatpush1.xpose.msra.mxu0 0.0
    %1186 = vmatprep.subr.mxu0 0.0
    %1187 = vmatpush1.xpose.msra.mxu0 0.0
    %1188 = vmatprep.subr.mxu0 0.0
    %1189 = vmatpush1.xpose.msra.mxu0 0.0
    %1190 = vmatprep.subr.mxu0 0.0
    %1191 = vmatpush1.xpose.msra.mxu0 0.0
    %1192 = vmatprep.subr.mxu0 0.0
    %1193 = vmatpush1.xpose.msra.mxu0 0.0
    %1194 = vmatprep.subr.mxu0 0.0
    %1195 = vmatpush1.xpose.msra.mxu0 0.0
    %1196 = vmatprep.subr.mxu0 0.0
    %1197 = vmatpush1.xpose.msra.mxu0 0.0
    %1198 = vmatprep.subr.mxu0 0.0
    %1199 = vmatpush1.xpose.msra.mxu0 0.0
    %1200 = vmatprep.subr.mxu0 0.0
    %1201 = vmatpush1.xpose.msra.mxu0 0.0
    %1202 = vmatprep.subr.mxu0 0.0
    %1203 = vmatpush1.xpose.msra.mxu0 0.0
    %1204 = vmatprep.subr.mxu0 0.0
    %1205 = vmatpush1.xpose.msra.mxu0 0.0
    %1206 = vmatprep.subr.mxu0 0.0
    %1207 = vmatpush1.xpose.msra.mxu0 0.0
    %1208 = vmatprep.subr.mxu0 0.0
    %1209 = vmatpush1.xpose.msra.mxu0 0.0
    %1210 = vmatprep.subr.mxu0 0.0
    %1211 = vmatpush1.xpose.msra.mxu0 0.0
    %1212 = vmatprep.subr.mxu0 0.0
    %1213 = vmatpush1.xpose.msra.mxu0 0.0
    %1214 = vmatprep.subr.mxu0 0.0
    %1215 = vmatpush1.xpose.msra.mxu0 0.0
    %1216 = vmatprep.subr.mxu0 0.0
    %1217 = vmatpush1.xpose.msra.mxu0 0.0
    %1218 = vmatprep.subr.mxu0 0.0
    %1219 = vmatpush1.xpose.msra.mxu0 0.0
    %1220 = vmatprep.subr.mxu0 0.0
    %1221 = vmatpush1.xpose.msra.mxu0 0.0
    %1222 = vmatprep.mubr.f32.mxu0 %v165
    %1223 = vmatmul.mubr.f32.gmra.mrb[0].mxu0 %v157
    %v1224 = vpop.f32.mrb[0].mxu0
    %v1225 = vadd.f32 %v1155, %v1224
    %v1226 = vpop.f32.mrb[0].mxu0
    %1227 = vdwg.mxu0
    %1228 = vmatprep.subr.mxu0 %v430
    %1229 = vmatpush1.xpose.msra.mxu0 %v428
    %1230 = vmatprep.subr.mxu0 0.0
    %1231 = vmatpush1.xpose.msra.mxu0 0.0
    %1232 = vmatprep.subr.mxu0 0.0
    %1233 = vmatpush1.xpose.msra.mxu0 0.0
    %1234 = vmatprep.subr.mxu0 0.0
    %1235 = vmatpush1.xpose.msra.mxu0 0.0
    %1236 = vmatprep.subr.mxu0 0.0
    %1237 = vmatpush1.xpose.msra.mxu0 0.0
    %1238 = vmatprep.subr.mxu0 0.0
    %1239 = vmatpush1.xpose.msra.mxu0 0.0
    %1240 = vmatprep.subr.mxu0 0.0
    %1241 = vmatpush1.xpose.msra.mxu0 0.0
    %1242 = vmatprep.subr.mxu0 0.0
    %1243 = vmatpush1.xpose.msra.mxu0 0.0
    %1244 = vmatprep.subr.mxu0 0.0
    %1245 = vmatpush1.xpose.msra.mxu0 0.0
    %1246 = vmatprep.subr.mxu0 0.0
    %1247 = vmatpush1.xpose.msra.mxu0 0.0
    %1248 = vmatprep.subr.mxu0 0.0
    %1249 = vmatpush1.xpose.msra.mxu0 0.0
    %1250 = vmatprep.subr.mxu0 0.0
    %1251 = vmatpush1.xpose.msra.mxu0 0.0
    %1252 = vmatprep.subr.mxu0 0.0
    %1253 = vmatpush1.xpose.msra.mxu0 0.0
    %1254 = vmatprep.subr.mxu0 0.0
    %1255 = vmatpush1.xpose.msra.mxu0 0.0
    %1256 = vmatprep.subr.mxu0 0.0
    %1257 = vmatpush1.xpose.msra.mxu0 0.0
    %1258 = vmatprep.subr.mxu0 0.0
    %1259 = vmatpush1.xpose.msra.mxu0 0.0
    %1260 = vmatprep.subr.mxu0 0.0
    %1261 = vmatpush1.xpose.msra.mxu0 0.0
    %1262 = vmatprep.subr.mxu0 0.0
    %1263 = vmatpush1.xpose.msra.mxu0 0.0
    %1264 = vmatprep.subr.mxu0 0.0
    %1265 = vmatpush1.xpose.msra.mxu0 0.0
    %1266 = vmatprep.subr.mxu0 0.0
    %1267 = vmatpush1.xpose.msra.mxu0 0.0
    %1268 = vmatprep.subr.mxu0 0.0
    %1269 = vmatpush1.xpose.msra.mxu0 0.0
    %1270 = vmatprep.subr.mxu0 0.0
    %1271 = vmatpush1.xpose.msra.mxu0 0.0
    %1272 = vmatprep.subr.mxu0 0.0
    %1273 = vmatpush1.xpose.msra.mxu0 0.0
    %1274 = vmatprep.subr.mxu0 0.0
    %1275 = vmatpush1.xpose.msra.mxu0 0.0
    %1276 = vmatprep.subr.mxu0 0.0
    %1277 = vmatpush1.xpose.msra.mxu0 0.0
    %1278 = vmatprep.subr.mxu0 0.0
    %1279 = vmatpush1.xpose.msra.mxu0 0.0
    %1280 = vmatprep.subr.mxu0 0.0
    %1281 = vmatpush1.xpose.msra.mxu0 0.0
    %1282 = vmatprep.subr.mxu0 0.0
    %1283 = vmatpush1.xpose.msra.mxu0 0.0
    %1284 = vmatprep.subr.mxu0 0.0
    %1285 = vmatpush1.xpose.msra.mxu0 0.0
    %1286 = vmatprep.subr.mxu0 0.0
    %1287 = vmatpush1.xpose.msra.mxu0 0.0
    %1288 = vmatprep.subr.mxu0 0.0
    %1289 = vmatpush1.xpose.msra.mxu0 0.0
    %1290 = vmatprep.subr.mxu0 0.0
    %1291 = vmatpush1.xpose.msra.mxu0 0.0
    %1292 = vmatprep.mubr.f32.mxu0 %v166
    %1293 = vmatmul.mubr.f32.gmra.mrb[0].mxu0 %v164
    %v1294 = vpop.f32.mrb[0].mxu0
    %v1295 = vadd.f32 %v1225, %v1294
    %v1296 = vpop.f32.mrb[0].mxu0
    %1297 = vdwg.mxu0
    %1298 = vmatprep.subr.mxu0 %v446
    %1299 = vmatpush1.xpose.msra.mxu0 %v438
    %1300 = vmatprep.subr.mxu0 0.0
    %1301 = vmatpush1.xpose.msra.mxu0 0.0
    %1302 = vmatprep.subr.mxu0 0.0
    %1303 = vmatpush1.xpose.msra.mxu0 0.0
    %1304 = vmatprep.subr.mxu0 0.0
    %1305 = vmatpush1.xpose.msra.mxu0 0.0
    %1306 = vmatprep.subr.mxu0 0.0
    %1307 = vmatpush1.xpose.msra.mxu0 0.0
    %1308 = vmatprep.subr.mxu0 0.0
    %1309 = vmatpush1.xpose.msra.mxu0 0.0
    %1310 = vmatprep.subr.mxu0 0.0
    %1311 = vmatpush1.xpose.msra.mxu0 0.0
    %1312 = vmatprep.subr.mxu0 0.0
    %1313 = vmatpush1.xpose.msra.mxu0 0.0
    %1314 = vmatprep.subr.mxu0 0.0
    %1315 = vmatpush1.xpose.msra.mxu0 0.0
    %1316 = vmatprep.subr.mxu0 0.0
    %1317 = vmatpush1.xpose.msra.mxu0 0.0
    %1318 = vmatprep.subr.mxu0 0.0
    %1319 = vmatpush1.xpose.msra.mxu0 0.0
    %1320 = vmatprep.subr.mxu0 0.0
    %1321 = vmatpush1.xpose.msra.mxu0 0.0
    %1322 = vmatprep.subr.mxu0 0.0
    %1323 = vmatpush1.xpose.msra.mxu0 0.0
    %1324 = vmatprep.subr.mxu0 0.0
    %1325 = vmatpush1.xpose.msra.mxu0 0.0
    %1326 = vmatprep.subr.mxu0 0.0
    %1327 = vmatpush1.xpose.msra.mxu0 0.0
    %1328 = vmatprep.subr.mxu0 0.0
    %1329 = vmatpush1.xpose.msra.mxu0 0.0
    %1330 = vmatprep.subr.mxu0 0.0
    %1331 = vmatpush1.xpose.msra.mxu0 0.0
    %1332 = vmatprep.subr.mxu0 0.0
    %1333 = vmatpush1.xpose.msra.mxu0 0.0
    %1334 = vmatprep.subr.mxu0 0.0
    %1335 = vmatpush1.xpose.msra.mxu0 0.0
    %1336 = vmatprep.subr.mxu0 0.0
    %1337 = vmatpush1.xpose.msra.mxu0 0.0
    %1338 = vmatprep.subr.mxu0 0.0
    %1339 = vmatpush1.xpose.msra.mxu0 0.0
    %1340 = vmatprep.subr.mxu0 0.0
    %1341 = vmatpush1.xpose.msra.mxu0 0.0
    %1342 = vmatprep.subr.mxu0 0.0
    %1343 = vmatpush1.xpose.msra.mxu0 0.0
    %1344 = vmatprep.subr.mxu0 0.0
    %1345 = vmatpush1.xpose.msra.mxu0 0.0
    %1346 = vmatprep.subr.mxu0 0.0
    %1347 = vmatpush1.xpose.msra.mxu0 0.0
    %1348 = vmatprep.subr.mxu0 0.0
    %1349 = vmatpush1.xpose.msra.mxu0 0.0
    %1350 = vmatprep.subr.mxu0 0.0
    %1351 = vmatpush1.xpose.msra.mxu0 0.0
    %1352 = vmatprep.subr.mxu0 0.0
    %1353 = vmatpush1.xpose.msra.mxu0 0.0
    %1354 = vmatprep.subr.mxu0 0.0
    %1355 = vmatpush1.xpose.msra.mxu0 0.0
    %1356 = vmatprep.subr.mxu0 0.0
    %1357 = vmatpush1.xpose.msra.mxu0 0.0
    %1358 = vmatprep.subr.mxu0 0.0
    %1359 = vmatpush1.xpose.msra.mxu0 0.0
    %1360 = vmatprep.subr.mxu0 0.0
    %1361 = vmatpush1.xpose.msra.mxu0 0.0
    %1362 = vmatprep.mubr.f32.mxu0 %v182
    %1363 = vmatmul.mubr.f32.gmra.mrb[0].mxu0 %v174
    %v1364 = vpop.f32.mrb[0].mxu0
    %v1365 = vadd.f32 %v1295, %v1364
    %v1366 = vpop.f32.mrb[0].mxu0
    %1367 = vdwg.mxu0
    %1368 = vmatprep.subr.mxu0 %v447
    %1369 = vmatpush1.xpose.msra.mxu0 %v445
    %1370 = vmatprep.subr.mxu0 0.0
    %1371 = vmatpush1.xpose.msra.mxu0 0.0
    %1372 = vmatprep.subr.mxu0 0.0
    %1373 = vmatpush1.xpose.msra.mxu0 0.0
    %1374 = vmatprep.subr.mxu0 0.0
    %1375 = vmatpush1.xpose.msra.mxu0 0.0
    %1376 = vmatprep.subr.mxu0 0.0
    %1377 = vmatpush1.xpose.msra.mxu0 0.0
    %1378 = vmatprep.subr.mxu0 0.0
    %1379 = vmatpush1.xpose.msra.mxu0 0.0
    %1380 = vmatprep.subr.mxu0 0.0
    %1381 = vmatpush1.xpose.msra.mxu0 0.0
    %1382 = vmatprep.subr.mxu0 0.0
    %1383 = vmatpush1.xpose.msra.mxu0 0.0
    %1384 = vmatprep.subr.mxu0 0.0
    %1385 = vmatpush1.xpose.msra.mxu0 0.0
    %1386 = vmatprep.subr.mxu0 0.0
    %1387 = vmatpush1.xpose.msra.mxu0 0.0
    %1388 = vmatprep.subr.mxu0 0.0
    %1389 = vmatpush1.xpose.msra.mxu0 0.0
    %1390 = vmatprep.subr.mxu0 0.0
    %1391 = vmatpush1.xpose.msra.mxu0 0.0
    %1392 = vmatprep.subr.mxu0 0.0
    %1393 = vmatpush1.xpose.msra.mxu0 0.0
    %1394 = vmatprep.subr.mxu0 0.0
    %1395 = vmatpush1.xpose.msra.mxu0 0.0
    %1396 = vmatprep.subr.mxu0 0.0
    %1397 = vmatpush1.xpose.msra.mxu0 0.0
    %1398 = vmatprep.subr.mxu0 0.0
    %1399 = vmatpush1.xpose.msra.mxu0 0.0
    %1400 = vmatprep.subr.mxu0 0.0
    %1401 = vmatpush1.xpose.msra.mxu0 0.0
    %1402 = vmatprep.subr.mxu0 0.0
    %1403 = vmatpush1.xpose.msra.mxu0 0.0
    %1404 = vmatprep.subr.mxu0 0.0
    %1405 = vmatpush1.xpose.msra.mxu0 0.0
    %1406 = vmatprep.subr.mxu0 0.0
    %1407 = vmatpush1.xpose.msra.mxu0 0.0
    %1408 = vmatprep.subr.mxu0 0.0
    %1409 = vmatpush1.xpose.msra.mxu0 0.0
    %1410 = vmatprep.subr.mxu0 0.0
    %1411 = vmatpush1.xpose.msra.mxu0 0.0
    %1412 = vmatprep.subr.mxu0 0.0
    %1413 = vmatpush1.xpose.msra.mxu0 0.0
    %1414 = vmatprep.subr.mxu0 0.0
    %1415 = vmatpush1.xpose.msra.mxu0 0.0
    %1416 = vmatprep.subr.mxu0 0.0
    %1417 = vmatpush1.xpose.msra.mxu0 0.0
    %1418 = vmatprep.subr.mxu0 0.0
    %1419 = vmatpush1.xpose.msra.mxu0 0.0
    %1420 = vmatprep.subr.mxu0 0.0
    %1421 = vmatpush1.xpose.msra.mxu0 0.0
    %1422 = vmatprep.subr.mxu0 0.0
    %1423 = vmatpush1.xpose.msra.mxu0 0.0
    %1424 = vmatprep.subr.mxu0 0.0
    %1425 = vmatpush1.xpose.msra.mxu0 0.0
    %1426 = vmatprep.subr.mxu0 0.0
    %1427 = vmatpush1.xpose.msra.mxu0 0.0
    %1428 = vmatprep.subr.mxu0 0.0
    %1429 = vmatpush1.xpose.msra.mxu0 0.0
    %1430 = vmatprep.subr.mxu0 0.0
    %1431 = vmatpush1.xpose.msra.mxu0 0.0
    %1432 = vmatprep.mubr.f32.mxu0 %v183
    %1433 = vmatmul.mubr.f32.gmra.mrb[0].mxu0 %v181
    %v1434 = vpop.f32.mrb[0].mxu0
    %v1435 = vadd.f32 %v1365, %v1434
    %v1436 = vpop.f32.mrb[0].mxu0
    %1437 = vdwg.mxu0
    %1438 = vmatprep.subr.mxu0 %v463
    %1439 = vmatpush1.xpose.msra.mxu0 %v455
    %1440 = vmatprep.subr.mxu0 0.0
    %1441 = vmatpush1.xpose.msra.mxu0 0.0
    %1442 = vmatprep.subr.mxu0 0.0
    %1443 = vmatpush1.xpose.msra.mxu0 0.0
    %1444 = vmatprep.subr.mxu0 0.0
    %1445 = vmatpush1.xpose.msra.mxu0 0.0
    %1446 = vmatprep.subr.mxu0 0.0
    %1447 = vmatpush1.xpose.msra.mxu0 0.0
    %1448 = vmatprep.subr.mxu0 0.0
    %1449 = vmatpush1.xpose.msra.mxu0 0.0
    %1450 = vmatprep.subr.mxu0 0.0
    %1451 = vmatpush1.xpose.msra.mxu0 0.0
    %1452 = vmatprep.subr.mxu0 0.0
    %1453 = vmatpush1.xpose.msra.mxu0 0.0
    %1454 = vmatprep.subr.mxu0 0.0
    %1455 = vmatpush1.xpose.msra.mxu0 0.0
    %1456 = vmatprep.subr.mxu0 0.0
    %1457 = vmatpush1.xpose.msra.mxu0 0.0
    %1458 = vmatprep.subr.mxu0 0.0
    %1459 = vmatpush1.xpose.msra.mxu0 0.0
    %1460 = vmatprep.subr.mxu0 0.0
    %1461 = vmatpush1.xpose.msra.mxu0 0.0
    %1462 = vmatprep.subr.mxu0 0.0
    %1463 = vmatpush1.xpose.msra.mxu0 0.0
    %1464 = vmatprep.subr.mxu0 0.0
    %1465 = vmatpush1.xpose.msra.mxu0 0.0
    %1466 = vmatprep.subr.mxu0 0.0
    %1467 = vmatpush1.xpose.msra.mxu0 0.0
    %1468 = vmatprep.subr.mxu0 0.0
    %1469 = vmatpush1.xpose.msra.mxu0 0.0
    %1470 = vmatprep.subr.mxu0 0.0
    %1471 = vmatpush1.xpose.msra.mxu0 0.0
    %1472 = vmatprep.subr.mxu0 0.0
    %1473 = vmatpush1.xpose.msra.mxu0 0.0
    %1474 = vmatprep.subr.mxu0 0.0
    %1475 = vmatpush1.xpose.msra.mxu0 0.0
    %1476 = vmatprep.subr.mxu0 0.0
    %1477 = vmatpush1.xpose.msra.mxu0 0.0
    %1478 = vmatprep.subr.mxu0 0.0
    %1479 = vmatpush1.xpose.msra.mxu0 0.0
    %1480 = vmatprep.subr.mxu0 0.0
    %1481 = vmatpush1.xpose.msra.mxu0 0.0
    %1482 = vmatprep.subr.mxu0 0.0
    %1483 = vmatpush1.xpose.msra.mxu0 0.0
    %1484 = vmatprep.subr.mxu0 0.0
    %1485 = vmatpush1.xpose.msra.mxu0 0.0
    %1486 = vmatprep.subr.mxu0 0.0
    %1487 = vmatpush1.xpose.msra.mxu0 0.0
    %1488 = vmatprep.subr.mxu0 0.0
    %1489 = vmatpush1.xpose.msra.mxu0 0.0
    %1490 = vmatprep.subr.mxu0 0.0
    %1491 = vmatpush1.xpose.msra.mxu0 0.0
    %1492 = vmatprep.subr.mxu0 0.0
    %1493 = vmatpush1.xpose.msra.mxu0 0.0
    %1494 = vmatprep.subr.mxu0 0.0
    %1495 = vmatpush1.xpose.msra.mxu0 0.0
    %1496 = vmatprep.subr.mxu0 0.0
    %1497 = vmatpush1.xpose.msra.mxu0 0.0
    %1498 = vmatprep.subr.mxu0 0.0
    %1499 = vmatpush1.xpose.msra.mxu0 0.0
    %1500 = vmatprep.subr.mxu0 0.0
    %1501 = vmatpush1.xpose.msra.mxu0 0.0
    %1502 = vmatprep.mubr.f32.mxu0 %v199
    %1503 = vmatmul.mubr.f32.gmra.mrb[0].mxu0 %v191
    %v1504 = vpop.f32.mrb[0].mxu0
    %v1505 = vadd.f32 %v1435, %v1504
    %v1506 = vpop.f32.mrb[0].mxu0
    %1507 = vdwg.mxu0
    %1508 = vmatprep.subr.mxu0 %v464
    %1509 = vmatpush1.xpose.msra.mxu0 %v462
    %1510 = vmatprep.subr.mxu0 0.0
    %1511 = vmatpush1.xpose.msra.mxu0 0.0
    %1512 = vmatprep.subr.mxu0 0.0
    %1513 = vmatpush1.xpose.msra.mxu0 0.0
    %1514 = vmatprep.subr.mxu0 0.0
    %1515 = vmatpush1.xpose.msra.mxu0 0.0
    %1516 = vmatprep.subr.mxu0 0.0
    %1517 = vmatpush1.xpose.msra.mxu0 0.0
    %1518 = vmatprep.subr.mxu0 0.0
    %1519 = vmatpush1.xpose.msra.mxu0 0.0
    %1520 = vmatprep.subr.mxu0 0.0
    %1521 = vmatpush1.xpose.msra.mxu0 0.0
    %1522 = vmatprep.subr.mxu0 0.0
    %1523 = vmatpush1.xpose.msra.mxu0 0.0
    %1524 = vmatprep.subr.mxu0 0.0
    %1525 = vmatpush1.xpose.msra.mxu0 0.0
    %1526 = vmatprep.subr.mxu0 0.0
    %1527 = vmatpush1.xpose.msra.mxu0 0.0
    %1528 = vmatprep.subr.mxu0 0.0
    %1529 = vmatpush1.xpose.msra.mxu0 0.0
    %1530 = vmatprep.subr.mxu0 0.0
    %1531 = vmatpush1.xpose.msra.mxu0 0.0
    %1532 = vmatprep.subr.mxu0 0.0
    %1533 = vmatpush1.xpose.msra.mxu0 0.0
    %1534 = vmatprep.subr.mxu0 0.0
    %1535 = vmatpush1.xpose.msra.mxu0 0.0
    %1536 = vmatprep.subr.mxu0 0.0
    %1537 = vmatpush1.xpose.msra.mxu0 0.0
    %1538 = vmatprep.subr.mxu0 0.0
    %1539 = vmatpush1.xpose.msra.mxu0 0.0
    %1540 = vmatprep.subr.mxu0 0.0
    %1541 = vmatpush1.xpose.msra.mxu0 0.0
    %1542 = vmatprep.subr.mxu0 0.0
    %1543 = vmatpush1.xpose.msra.mxu0 0.0
    %1544 = vmatprep.subr.mxu0 0.0
    %1545 = vmatpush1.xpose.msra.mxu0 0.0
    %1546 = vmatprep.subr.mxu0 0.0
    %1547 = vmatpush1.xpose.msra.mxu0 0.0
    %1548 = vmatprep.subr.mxu0 0.0
    %1549 = vmatpush1.xpose.msra.mxu0 0.0
    %1550 = vmatprep.subr.mxu0 0.0
    %1551 = vmatpush1.xpose.msra.mxu0 0.0
    %1552 = vmatprep.subr.mxu0 0.0
    %1553 = vmatpush1.xpose.msra.mxu0 0.0
    %1554 = vmatprep.subr.mxu0 0.0
    %1555 = vmatpush1.xpose.msra.mxu0 0.0
    %1556 = vmatprep.subr.mxu0 0.0
    %1557 = vmatpush1.xpose.msra.mxu0 0.0
    %1558 = vmatprep.subr.mxu0 0.0
    %1559 = vmatpush1.xpose.msra.mxu0 0.0
    %1560 = vmatprep.subr.mxu0 0.0
    %1561 = vmatpush1.xpose.msra.mxu0 0.0
    %1562 = vmatprep.subr.mxu0 0.0
    %1563 = vmatpush1.xpose.msra.mxu0 0.0
    %1564 = vmatprep.subr.mxu0 0.0
    %1565 = vmatpush1.xpose.msra.mxu0 0.0
    %1566 = vmatprep.subr.mxu0 0.0
    %1567 = vmatpush1.xpose.msra.mxu0 0.0
    %1568 = vmatprep.subr.mxu0 0.0
    %1569 = vmatpush1.xpose.msra.mxu0 0.0
    %1570 = vmatprep.subr.mxu0 0.0
    %1571 = vmatpush1.xpose.msra.mxu0 0.0
    %1572 = vmatprep.mubr.f32.mxu0 %v200
    %1573 = vmatmul.mubr.f32.gmra.mrb[0].mxu0 %v198
    %v1574 = vpop.f32.mrb[0].mxu0
    %v1575 = vadd.f32 %v1505, %v1574
    %v1576 = vpop.f32.mrb[0].mxu0
    %1577 = vdwg.mxu0
    %1578 = vmatprep.subr.mxu0 %v480
    %1579 = vmatpush1.xpose.msra.mxu0 %v472
    %1580 = vmatprep.subr.mxu0 0.0
    %1581 = vmatpush1.xpose.msra.mxu0 0.0
    %1582 = vmatprep.subr.mxu0 0.0
    %1583 = vmatpush1.xpose.msra.mxu0 0.0
    %1584 = vmatprep.subr.mxu0 0.0
    %1585 = vmatpush1.xpose.msra.mxu0 0.0
    %1586 = vmatprep.subr.mxu0 0.0
    %1587 = vmatpush1.xpose.msra.mxu0 0.0
    %1588 = vmatprep.subr.mxu0 0.0
    %1589 = vmatpush1.xpose.msra.mxu0 0.0
    %1590 = vmatprep.subr.mxu0 0.0
    %1591 = vmatpush1.xpose.msra.mxu0 0.0
    %1592 = vmatprep.subr.mxu0 0.0
    %1593 = vmatpush1.xpose.msra.mxu0 0.0
    %1594 = vmatprep.subr.mxu0 0.0
    %1595 = vmatpush1.xpose.msra.mxu0 0.0
    %1596 = vmatprep.subr.mxu0 0.0
    %1597 = vmatpush1.xpose.msra.mxu0 0.0
    %1598 = vmatprep.subr.mxu0 0.0
    %1599 = vmatpush1.xpose.msra.mxu0 0.0
    %1600 = vmatprep.subr.mxu0 0.0
    %1601 = vmatpush1.xpose.msra.mxu0 0.0
    %1602 = vmatprep.subr.mxu0 0.0
    %1603 = vmatpush1.xpose.msra.mxu0 0.0
    %1604 = vmatprep.subr.mxu0 0.0
    %1605 = vmatpush1.xpose.msra.mxu0 0.0
    %1606 = vmatprep.subr.mxu0 0.0
    %1607 = vmatpush1.xpose.msra.mxu0 0.0
    %1608 = vmatprep.subr.mxu0 0.0
    %1609 = vmatpush1.xpose.msra.mxu0 0.0
    %1610 = vmatprep.subr.mxu0 0.0
    %1611 = vmatpush1.xpose.msra.mxu0 0.0
    %1612 = vmatprep.subr.mxu0 0.0
    %1613 = vmatpush1.xpose.msra.mxu0 0.0
    %1614 = vmatprep.subr.mxu0 0.0
    %1615 = vmatpush1.xpose.msra.mxu0 0.0
    %1616 = vmatprep.subr.mxu0 0.0
    %1617 = vmatpush1.xpose.msra.mxu0 0.0
    %1618 = vmatprep.subr.mxu0 0.0
    %1619 = vmatpush1.xpose.msra.mxu0 0.0
    %1620 = vmatprep.subr.mxu0 0.0
    %1621 = vmatpush1.xpose.msra.mxu0 0.0
    %1622 = vmatprep.subr.mxu0 0.0
    %1623 = vmatpush1.xpose.msra.mxu0 0.0
    %1624 = vmatprep.subr.mxu0 0.0
    %1625 = vmatpush1.xpose.msra.mxu0 0.0
    %1626 = vmatprep.subr.mxu0 0.0
    %1627 = vmatpush1.xpose.msra.mxu0 0.0
    %1628 = vmatprep.subr.mxu0 0.0
    %1629 = vmatpush1.xpose.msra.mxu0 0.0
    %1630 = vmatprep.subr.mxu0 0.0
    %1631 = vmatpush1.xpose.msra.mxu0 0.0
    %1632 = vmatprep.subr.mxu0 0.0
    %1633 = vmatpush1.xpose.msra.mxu0 0.0
    %1634 = vmatprep.subr.mxu0 0.0
    %1635 = vmatpush1.xpose.msra.mxu0 0.0
    %1636 = vmatprep.subr.mxu0 0.0
    %1637 = vmatpush1.xpose.msra.mxu0 0.0
    %1638 = vmatprep.subr.mxu0 0.0
    %1639 = vmatpush1.xpose.msra.mxu0 0.0
    %1640 = vmatprep.subr.mxu0 0.0
    %1641 = vmatpush1.xpose.msra.mxu0 0.0
    %1642 = vmatprep.mubr.f32.mxu0 %v216
    %1643 = vmatmul.mubr.f32.gmra.mrb[0].mxu0 %v208
    %v1644 = vpop.f32.mrb[0].mxu0
    %v1645 = vadd.f32 %v1575, %v1644
    %v1646 = vpop.f32.mrb[0].mxu0
    %1647 = vdwg.mxu0
    %1648 = vmatprep.subr.mxu0 %v481
    %1649 = vmatpush1.xpose.msra.mxu0 %v479
    %1650 = vmatprep.subr.mxu0 0.0
    %1651 = vmatpush1.xpose.msra.mxu0 0.0
    %1652 = vmatprep.subr.mxu0 0.0
    %1653 = vmatpush1.xpose.msra.mxu0 0.0
    %1654 = vmatprep.subr.mxu0 0.0
    %1655 = vmatpush1.xpose.msra.mxu0 0.0
    %1656 = vmatprep.subr.mxu0 0.0
    %1657 = vmatpush1.xpose.msra.mxu0 0.0
    %1658 = vmatprep.subr.mxu0 0.0
    %1659 = vmatpush1.xpose.msra.mxu0 0.0
    %1660 = vmatprep.subr.mxu0 0.0
    %1661 = vmatpush1.xpose.msra.mxu0 0.0
    %1662 = vmatprep.subr.mxu0 0.0
    %1663 = vmatpush1.xpose.msra.mxu0 0.0
    %1664 = vmatprep.subr.mxu0 0.0
    %1665 = vmatpush1.xpose.msra.mxu0 0.0
    %1666 = vmatprep.subr.mxu0 0.0
    %1667 = vmatpush1.xpose.msra.mxu0 0.0
    %1668 = vmatprep.subr.mxu0 0.0
    %1669 = vmatpush1.xpose.msra.mxu0 0.0
    %1670 = vmatprep.subr.mxu0 0.0
    %1671 = vmatpush1.xpose.msra.mxu0 0.0
    %1672 = vmatprep.subr.mxu0 0.0
    %1673 = vmatpush1.xpose.msra.mxu0 0.0
    %1674 = vmatprep.subr.mxu0 0.0
    %1675 = vmatpush1.xpose.msra.mxu0 0.0
    %1676 = vmatprep.subr.mxu0 0.0
    %1677 = vmatpush1.xpose.msra.mxu0 0.0
    %1678 = vmatprep.subr.mxu0 0.0
    %1679 = vmatpush1.xpose.msra.mxu0 0.0
    %1680 = vmatprep.subr.mxu0 0.0
    %1681 = vmatpush1.xpose.msra.mxu0 0.0
    %1682 = vmatprep.subr.mxu0 0.0
    %1683 = vmatpush1.xpose.msra.mxu0 0.0
    %1684 = vmatprep.subr.mxu0 0.0
    %1685 = vmatpush1.xpose.msra.mxu0 0.0
    %1686 = vmatprep.subr.mxu0 0.0
    %1687 = vmatpush1.xpose.msra.mxu0 0.0
    %1688 = vmatprep.subr.mxu0 0.0
    %1689 = vmatpush1.xpose.msra.mxu0 0.0
    %1690 = vmatprep.subr.mxu0 0.0
    %1691 = vmatpush1.xpose.msra.mxu0 0.0
    %1692 = vmatprep.subr.mxu0 0.0
    %1693 = vmatpush1.xpose.msra.mxu0 0.0
    %1694 = vmatprep.subr.mxu0 0.0
    %1695 = vmatpush1.xpose.msra.mxu0 0.0
    %1696 = vmatprep.subr.mxu0 0.0
    %1697 = vmatpush1.xpose.msra.mxu0 0.0
    %1698 = vmatprep.subr.mxu0 0.0
    %1699 = vmatpush1.xpose.msra.mxu0 0.0
    %1700 = vmatprep.subr.mxu0 0.0
    %1701 = vmatpush1.xpose.msra.mxu0 0.0
    %1702 = vmatprep.subr.mxu0 0.0
    %1703 = vmatpush1.xpose.msra.mxu0 0.0
    %1704 = vmatprep.subr.mxu0 0.0
    %1705 = vmatpush1.xpose.msra.mxu0 0.0
    %1706 = vmatprep.subr.mxu0 0.0
    %1707 = vmatpush1.xpose.msra.mxu0 0.0
    %1708 = vmatprep.subr.mxu0 0.0
    %1709 = vmatpush1.xpose.msra.mxu0 0.0
    %1710 = vmatprep.subr.mxu0 0.0
    %1711 = vmatpush1.xpose.msra.mxu0 0.0
    %1712 = vmatprep.mubr.f32.mxu0 %v217
    %1713 = vmatmul.mubr.f32.gmra.mrb[0].mxu0 %v215
    %v1714 = vpop.f32.mrb[0].mxu0
    %v1715 = vadd.f32 %v1645, %v1714
    %v1716 = vpop.f32.mrb[0].mxu0
    %1717 = vdwg.mxu0
    %1718 = vmatprep.subr.mxu0 %v497
    %1719 = vmatpush1.xpose.msra.mxu0 %v489
    %1720 = vmatprep.subr.mxu0 0.0
    %1721 = vmatpush1.xpose.msra.mxu0 0.0
    %1722 = vmatprep.subr.mxu0 0.0
    %1723 = vmatpush1.xpose.msra.mxu0 0.0
    %1724 = vmatprep.subr.mxu0 0.0
    %1725 = vmatpush1.xpose.msra.mxu0 0.0
    %1726 = vmatprep.subr.mxu0 0.0
    %1727 = vmatpush1.xpose.msra.mxu0 0.0
    %1728 = vmatprep.subr.mxu0 0.0
    %1729 = vmatpush1.xpose.msra.mxu0 0.0
    %1730 = vmatprep.subr.mxu0 0.0
    %1731 = vmatpush1.xpose.msra.mxu0 0.0
    %1732 = vmatprep.subr.mxu0 0.0
    %1733 = vmatpush1.xpose.msra.mxu0 0.0
    %1734 = vmatprep.subr.mxu0 0.0
    %1735 = vmatpush1.xpose.msra.mxu0 0.0
    %1736 = vmatprep.subr.mxu0 0.0
    %1737 = vmatpush1.xpose.msra.mxu0 0.0
    %1738 = vmatprep.subr.mxu0 0.0
    %1739 = vmatpush1.xpose.msra.mxu0 0.0
    %1740 = vmatprep.subr.mxu0 0.0
    %1741 = vmatpush1.xpose.msra.mxu0 0.0
    %1742 = vmatprep.subr.mxu0 0.0
    %1743 = vmatpush1.xpose.msra.mxu0 0.0
    %1744 = vmatprep.subr.mxu0 0.0
    %1745 = vmatpush1.xpose.msra.mxu0 0.0
    %1746 = vmatprep.subr.mxu0 0.0
    %1747 = vmatpush1.xpose.msra.mxu0 0.0
    %1748 = vmatprep.subr.mxu0 0.0
    %1749 = vmatpush1.xpose.msra.mxu0 0.0
    %1750 = vmatprep.subr.mxu0 0.0
    %1751 = vmatpush1.xpose.msra.mxu0 0.0
    %1752 = vmatprep.subr.mxu0 0.0
    %1753 = vmatpush1.xpose.msra.mxu0 0.0
    %1754 = vmatprep.subr.mxu0 0.0
    %1755 = vmatpush1.xpose.msra.mxu0 0.0
    %1756 = vmatprep.subr.mxu0 0.0
    %1757 = vmatpush1.xpose.msra.mxu0 0.0
    %1758 = vmatprep.subr.mxu0 0.0
    %1759 = vmatpush1.xpose.msra.mxu0 0.0
    %1760 = vmatprep.subr.mxu0 0.0
    %1761 = vmatpush1.xpose.msra.mxu0 0.0
    %1762 = vmatprep.subr.mxu0 0.0
    %1763 = vmatpush1.xpose.msra.mxu0 0.0
    %1764 = vmatprep.subr.mxu0 0.0
    %1765 = vmatpush1.xpose.msra.mxu0 0.0
    %1766 = vmatprep.subr.mxu0 0.0
    %1767 = vmatpush1.xpose.msra.mxu0 0.0
    %1768 = vmatprep.subr.mxu0 0.0
    %1769 = vmatpush1.xpose.msra.mxu0 0.0
    %1770 = vmatprep.subr.mxu0 0.0
    %1771 = vmatpush1.xpose.msra.mxu0 0.0
    %1772 = vmatprep.subr.mxu0 0.0
    %1773 = vmatpush1.xpose.msra.mxu0 0.0
    %1774 = vmatprep.subr.mxu0 0.0
    %1775 = vmatpush1.xpose.msra.mxu0 0.0
    %1776 = vmatprep.subr.mxu0 0.0
    %1777 = vmatpush1.xpose.msra.mxu0 0.0
    %1778 = vmatprep.subr.mxu0 0.0
    %1779 = vmatpush1.xpose.msra.mxu0 0.0
    %1780 = vmatprep.subr.mxu0 0.0
    %1781 = vmatpush1.xpose.msra.mxu0 0.0
    %1782 = vmatprep.mubr.f32.mxu0 %v233
    %1783 = vmatmul.mubr.f32.gmra.mrb[0].mxu0 %v225
    %v1784 = vpop.f32.mrb[0].mxu0
    %v1785 = vadd.f32 %v1715, %v1784
    %v1786 = vpop.f32.mrb[0].mxu0
    %1787 = vdwg.mxu0
    %1788 = vmatprep.subr.mxu0 %v498
    %1789 = vmatpush1.xpose.msra.mxu0 %v496
    %1790 = vmatprep.subr.mxu0 0.0
    %1791 = vmatpush1.xpose.msra.mxu0 0.0
    %1792 = vmatprep.subr.mxu0 0.0
    %1793 = vmatpush1.xpose.msra.mxu0 0.0
    %1794 = vmatprep.subr.mxu0 0.0
    %1795 = vmatpush1.xpose.msra.mxu0 0.0
    %1796 = vmatprep.subr.mxu0 0.0
    %1797 = vmatpush1.xpose.msra.mxu0 0.0
    %1798 = vmatprep.subr.mxu0 0.0
    %1799 = vmatpush1.xpose.msra.mxu0 0.0
    %1800 = vmatprep.subr.mxu0 0.0
    %1801 = vmatpush1.xpose.msra.mxu0 0.0
    %1802 = vmatprep.subr.mxu0 0.0
    %1803 = vmatpush1.xpose.msra.mxu0 0.0
    %1804 = vmatprep.subr.mxu0 0.0
    %1805 = vmatpush1.xpose.msra.mxu0 0.0
    %1806 = vmatprep.subr.mxu0 0.0
    %1807 = vmatpush1.xpose.msra.mxu0 0.0
    %1808 = vmatprep.subr.mxu0 0.0
    %1809 = vmatpush1.xpose.msra.mxu0 0.0
    %1810 = vmatprep.subr.mxu0 0.0
    %1811 = vmatpush1.xpose.msra.mxu0 0.0
    %1812 = vmatprep.subr.mxu0 0.0
    %1813 = vmatpush1.xpose.msra.mxu0 0.0
    %1814 = vmatprep.subr.mxu0 0.0
    %1815 = vmatpush1.xpose.msra.mxu0 0.0
    %1816 = vmatprep.subr.mxu0 0.0
    %1817 = vmatpush1.xpose.msra.mxu0 0.0
    %1818 = vmatprep.subr.mxu0 0.0
    %1819 = vmatpush1.xpose.msra.mxu0 0.0
    %1820 = vmatprep.subr.mxu0 0.0
    %1821 = vmatpush1.xpose.msra.mxu0 0.0
    %1822 = vmatprep.subr.mxu0 0.0
    %1823 = vmatpush1.xpose.msra.mxu0 0.0
    %1824 = vmatprep.subr.mxu0 0.0
    %1825 = vmatpush1.xpose.msra.mxu0 0.0
    %1826 = vmatprep.subr.mxu0 0.0
    %1827 = vmatpush1.xpose.msra.mxu0 0.0
    %1828 = vmatprep.subr.mxu0 0.0
    %1829 = vmatpush1.xpose.msra.mxu0 0.0
    %1830 = vmatprep.subr.mxu0 0.0
    %1831 = vmatpush1.xpose.msra.mxu0 0.0
    %1832 = vmatprep.subr.mxu0 0.0
    %1833 = vmatpush1.xpose.msra.mxu0 0.0
    %1834 = vmatprep.subr.mxu0 0.0
    %1835 = vmatpush1.xpose.msra.mxu0 0.0
    %1836 = vmatprep.subr.mxu0 0.0
    %1837 = vmatpush1.xpose.msra.mxu0 0.0
    %1838 = vmatprep.subr.mxu0 0.0
    %1839 = vmatpush1.xpose.msra.mxu0 0.0
    %1840 = vmatprep.subr.mxu0 0.0
    %1841 = vmatpush1.xpose.msra.mxu0 0.0
    %1842 = vmatprep.subr.mxu0 0.0
    %1843 = vmatpush1.xpose.msra.mxu0 0.0
    %1844 = vmatprep.subr.mxu0 0.0
    %1845 = vmatpush1.xpose.msra.mxu0 0.0
    %1846 = vmatprep.subr.mxu0 0.0
    %1847 = vmatpush1.xpose.msra.mxu0 0.0
    %1848 = vmatprep.subr.mxu0 0.0
    %1849 = vmatpush1.xpose.msra.mxu0 0.0
    %1850 = vmatprep.subr.mxu0 0.0
    %1851 = vmatpush1.xpose.msra.mxu0 0.0
    %1852 = vmatprep.mubr.f32.mxu0 %v234
    %1853 = vmatmul.mubr.f32.gmra.mrb[0].mxu0 %v232
    %v1854 = vpop.f32.mrb[0].mxu0
    %v1855 = vadd.f32 %v1785, %v1854
    %v1856 = vpop.f32.mrb[0].mxu0
    %1857 = vdwg.mxu0
    %1858 = vmatprep.subr.mxu0 %v514
    %1859 = vmatpush1.xpose.msra.mxu0 %v506
    %1860 = vmatprep.subr.mxu0 0.0
    %1861 = vmatpush1.xpose.msra.mxu0 0.0
    %1862 = vmatprep.subr.mxu0 0.0
    %1863 = vmatpush1.xpose.msra.mxu0 0.0
    %1864 = vmatprep.subr.mxu0 0.0
    %1865 = vmatpush1.xpose.msra.mxu0 0.0
    %1866 = vmatprep.subr.mxu0 0.0
    %1867 = vmatpush1.xpose.msra.mxu0 0.0
    %1868 = vmatprep.subr.mxu0 0.0
    %1869 = vmatpush1.xpose.msra.mxu0 0.0
    %1870 = vmatprep.subr.mxu0 0.0
    %1871 = vmatpush1.xpose.msra.mxu0 0.0
    %1872 = vmatprep.subr.mxu0 0.0
    %1873 = vmatpush1.xpose.msra.mxu0 0.0
    %1874 = vmatprep.subr.mxu0 0.0
    %1875 = vmatpush1.xpose.msra.mxu0 0.0
    %1876 = vmatprep.subr.mxu0 0.0
    %1877 = vmatpush1.xpose.msra.mxu0 0.0
    %1878 = vmatprep.subr.mxu0 0.0
    %1879 = vmatpush1.xpose.msra.mxu0 0.0
    %1880 = vmatprep.subr.mxu0 0.0
    %1881 = vmatpush1.xpose.msra.mxu0 0.0
    %1882 = vmatprep.subr.mxu0 0.0
    %1883 = vmatpush1.xpose.msra.mxu0 0.0
    %1884 = vmatprep.subr.mxu0 0.0
    %1885 = vmatpush1.xpose.msra.mxu0 0.0
    %1886 = vmatprep.subr.mxu0 0.0
    %1887 = vmatpush1.xpose.msra.mxu0 0.0
    %1888 = vmatprep.subr.mxu0 0.0
    %1889 = vmatpush1.xpose.msra.mxu0 0.0
    %1890 = vmatprep.subr.mxu0 0.0
    %1891 = vmatpush1.xpose.msra.mxu0 0.0
    %1892 = vmatprep.subr.mxu0 0.0
    %1893 = vmatpush1.xpose.msra.mxu0 0.0
    %1894 = vmatprep.subr.mxu0 0.0
    %1895 = vmatpush1.xpose.msra.mxu0 0.0
    %1896 = vmatprep.subr.mxu0 0.0
    %1897 = vmatpush1.xpose.msra.mxu0 0.0
    %1898 = vmatprep.subr.mxu0 0.0
    %1899 = vmatpush1.xpose.msra.mxu0 0.0
    %1900 = vmatprep.subr.mxu0 0.0
    %1901 = vmatpush1.xpose.msra.mxu0 0.0
    %1902 = vmatprep.subr.mxu0 0.0
    %1903 = vmatpush1.xpose.msra.mxu0 0.0
    %1904 = vmatprep.subr.mxu0 0.0
    %1905 = vmatpush1.xpose.msra.mxu0 0.0
    %1906 = vmatprep.subr.mxu0 0.0
    %1907 = vmatpush1.xpose.msra.mxu0 0.0
    %1908 = vmatprep.subr.mxu0 0.0
    %1909 = vmatpush1.xpose.msra.mxu0 0.0
    %1910 = vmatprep.subr.mxu0 0.0
    %1911 = vmatpush1.xpose.msra.mxu0 0.0
    %1912 = vmatprep.subr.mxu0 0.0
    %1913 = vmatpush1.xpose.msra.mxu0 0.0
    %1914 = vmatprep.subr.mxu0 0.0
    %1915 = vmatpush1.xpose.msra.mxu0 0.0
    %1916 = vmatprep.subr.mxu0 0.0
    %1917 = vmatpush1.xpose.msra.mxu0 0.0
    %1918 = vmatprep.subr.mxu0 0.0
    %1919 = vmatpush1.xpose.msra.mxu0 0.0
    %1920 = vmatprep.subr.mxu0 0.0
    %1921 = vmatpush1.xpose.msra.mxu0 0.0
    %1922 = vmatprep.mubr.f32.mxu0 %v250
    %1923 = vmatmul.mubr.f32.gmra.mrb[0].mxu0 %v242
    %v1924 = vpop.f32.mrb[0].mxu0
    %v1925 = vadd.f32 %v1855, %v1924
    %v1926 = vpop.f32.mrb[0].mxu0
    %1927 = vdwg.mxu0
    %1928 = vmatprep.subr.mxu0 %v515
    %1929 = vmatpush1.xpose.msra.mxu0 %v513
    %1930 = vmatprep.subr.mxu0 0.0
    %1931 = vmatpush1.xpose.msra.mxu0 0.0
    %1932 = vmatprep.subr.mxu0 0.0
    %1933 = vmatpush1.xpose.msra.mxu0 0.0
    %1934 = vmatprep.subr.mxu0 0.0
    %1935 = vmatpush1.xpose.msra.mxu0 0.0
    %1936 = vmatprep.subr.mxu0 0.0
    %1937 = vmatpush1.xpose.msra.mxu0 0.0
    %1938 = vmatprep.subr.mxu0 0.0
    %1939 = vmatpush1.xpose.msra.mxu0 0.0
    %1940 = vmatprep.subr.mxu0 0.0
    %1941 = vmatpush1.xpose.msra.mxu0 0.0
    %1942 = vmatprep.subr.mxu0 0.0
    %1943 = vmatpush1.xpose.msra.mxu0 0.0
    %1944 = vmatprep.subr.mxu0 0.0
    %1945 = vmatpush1.xpose.msra.mxu0 0.0
    %1946 = vmatprep.subr.mxu0 0.0
    %1947 = vmatpush1.xpose.msra.mxu0 0.0
    %1948 = vmatprep.subr.mxu0 0.0
    %1949 = vmatpush1.xpose.msra.mxu0 0.0
    %1950 = vmatprep.subr.mxu0 0.0
    %1951 = vmatpush1.xpose.msra.mxu0 0.0
    %1952 = vmatprep.subr.mxu0 0.0
    %1953 = vmatpush1.xpose.msra.mxu0 0.0
    %1954 = vmatprep.subr.mxu0 0.0
    %1955 = vmatpush1.xpose.msra.mxu0 0.0
    %1956 = vmatprep.subr.mxu0 0.0
    %1957 = vmatpush1.xpose.msra.mxu0 0.0
    %1958 = vmatprep.subr.mxu0 0.0
    %1959 = vmatpush1.xpose.msra.mxu0 0.0
    %1960 = vmatprep.subr.mxu0 0.0
    %1961 = vmatpush1.xpose.msra.mxu0 0.0
    %1962 = vmatprep.subr.mxu0 0.0
    %1963 = vmatpush1.xpose.msra.mxu0 0.0
    %1964 = vmatprep.subr.mxu0 0.0
    %1965 = vmatpush1.xpose.msra.mxu0 0.0
    %1966 = vmatprep.subr.mxu0 0.0
    %1967 = vmatpush1.xpose.msra.mxu0 0.0
    %1968 = vmatprep.subr.mxu0 0.0
    %1969 = vmatpush1.xpose.msra.mxu0 0.0
    %1970 = vmatprep.subr.mxu0 0.0
    %1971 = vmatpush1.xpose.msra.mxu0 0.0
    %1972 = vmatprep.subr.mxu0 0.0
    %1973 = vmatpush1.xpose.msra.mxu0 0.0
    %1974 = vmatprep.subr.mxu0 0.0
    %1975 = vmatpush1.xpose.msra.mxu0 0.0
    %1976 = vmatprep.subr.mxu0 0.0
    %1977 = vmatpush1.xpose.msra.mxu0 0.0
    %1978 = vmatprep.subr.mxu0 0.0
    %1979 = vmatpush1.xpose.msra.mxu0 0.0
    %1980 = vmatprep.subr.mxu0 0.0
    %1981 = vmatpush1.xpose.msra.mxu0 0.0
    %1982 = vmatprep.subr.mxu0 0.0
    %1983 = vmatpush1.xpose.msra.mxu0 0.0
    %1984 = vmatprep.subr.mxu0 0.0
    %1985 = vmatpush1.xpose.msra.mxu0 0.0
    %1986 = vmatprep.subr.mxu0 0.0
    %1987 = vmatpush1.xpose.msra.mxu0 0.0
    %1988 = vmatprep.subr.mxu0 0.0
    %1989 = vmatpush1.xpose.msra.mxu0 0.0
    %1990 = vmatprep.subr.mxu0 0.0
    %1991 = vmatpush1.xpose.msra.mxu0 0.0
    %1992 = vmatprep.mubr.f32.mxu0 %v251
    %1993 = vmatmul.mubr.f32.gmra.mrb[0].mxu0 %v249
    %v1994 = vpop.f32.mrb[0].mxu0
    %v1995 = vadd.f32 %v1925, %v1994
    %v1996 = vpop.f32.mrb[0].mxu0
    %1997 = vdwg.mxu0
    %1998 = vmatprep.subr.mxu0 %v531
    %1999 = vmatpush1.xpose.msra.mxu0 %v523
    %2000 = vmatprep.subr.mxu0 0.0
    %2001 = vmatpush1.xpose.msra.mxu0 0.0
    %2002 = vmatprep.subr.mxu0 0.0
    %2003 = vmatpush1.xpose.msra.mxu0 0.0
    %2004 = vmatprep.subr.mxu0 0.0
    %2005 = vmatpush1.xpose.msra.mxu0 0.0
    %2006 = vmatprep.subr.mxu0 0.0
    %2007 = vmatpush1.xpose.msra.mxu0 0.0
    %2008 = vmatprep.subr.mxu0 0.0
    %2009 = vmatpush1.xpose.msra.mxu0 0.0
    %2010 = vmatprep.subr.mxu0 0.0
    %2011 = vmatpush1.xpose.msra.mxu0 0.0
    %2012 = vmatprep.subr.mxu0 0.0
    %2013 = vmatpush1.xpose.msra.mxu0 0.0
    %2014 = vmatprep.subr.mxu0 0.0
    %2015 = vmatpush1.xpose.msra.mxu0 0.0
    %2016 = vmatprep.subr.mxu0 0.0
    %2017 = vmatpush1.xpose.msra.mxu0 0.0
    %2018 = vmatprep.subr.mxu0 0.0
    %2019 = vmatpush1.xpose.msra.mxu0 0.0
    %2020 = vmatprep.subr.mxu0 0.0
    %2021 = vmatpush1.xpose.msra.mxu0 0.0
    %2022 = vmatprep.subr.mxu0 0.0
    %2023 = vmatpush1.xpose.msra.mxu0 0.0
    %2024 = vmatprep.subr.mxu0 0.0
    %2025 = vmatpush1.xpose.msra.mxu0 0.0
    %2026 = vmatprep.subr.mxu0 0.0
    %2027 = vmatpush1.xpose.msra.mxu0 0.0
    %2028 = vmatprep.subr.mxu0 0.0
    %2029 = vmatpush1.xpose.msra.mxu0 0.0
    %2030 = vmatprep.subr.mxu0 0.0
    %2031 = vmatpush1.xpose.msra.mxu0 0.0
    %2032 = vmatprep.subr.mxu0 0.0
    %2033 = vmatpush1.xpose.msra.mxu0 0.0
    %2034 = vmatprep.subr.mxu0 0.0
    %2035 = vmatpush1.xpose.msra.mxu0 0.0
    %2036 = vmatprep.subr.mxu0 0.0
    %2037 = vmatpush1.xpose.msra.mxu0 0.0
    %2038 = vmatprep.subr.mxu0 0.0
    %2039 = vmatpush1.xpose.msra.mxu0 0.0
    %2040 = vmatprep.subr.mxu0 0.0
    %2041 = vmatpush1.xpose.msra.mxu0 0.0
    %2042 = vmatprep.subr.mxu0 0.0
    %2043 = vmatpush1.xpose.msra.mxu0 0.0
    %2044 = vmatprep.subr.mxu0 0.0
    %2045 = vmatpush1.xpose.msra.mxu0 0.0
    %2046 = vmatprep.subr.mxu0 0.0
    %2047 = vmatpush1.xpose.msra.mxu0 0.0
    %2048 = vmatprep.subr.mxu0 0.0
    %2049 = vmatpush1.xpose.msra.mxu0 0.0
    %2050 = vmatprep.subr.mxu0 0.0
    %2051 = vmatpush1.xpose.msra.mxu0 0.0
    %2052 = vmatprep.subr.mxu0 0.0
    %2053 = vmatpush1.xpose.msra.mxu0 0.0
    %2054 = vmatprep.subr.mxu0 0.0
    %2055 = vmatpush1.xpose.msra.mxu0 0.0
    %2056 = vmatprep.subr.mxu0 0.0
    %2057 = vmatpush1.xpose.msra.mxu0 0.0
    %2058 = vmatprep.subr.mxu0 0.0
    %2059 = vmatpush1.xpose.msra.mxu0 0.0
    %2060 = vmatprep.subr.mxu0 0.0
    %2061 = vmatpush1.xpose.msra.mxu0 0.0
    %2062 = vmatprep.mubr.f32.mxu0 %v267
    %2063 = vmatmul.mubr.f32.gmra.mrb[0].mxu0 %v259
    %v2064 = vpop.f32.mrb[0].mxu0
    %v2065 = vadd.f32 %v1995, %v2064
    %v2066 = vpop.f32.mrb[0].mxu0
    %2067 = vdwg.mxu0
    %2068 = vmatprep.subr.mxu0 %v532
    %2069 = vmatpush1.xpose.msra.mxu0 %v530
    %2070 = vmatprep.subr.mxu0 0.0
    %2071 = vmatpush1.xpose.msra.mxu0 0.0
    %2072 = vmatprep.subr.mxu0 0.0
    %2073 = vmatpush1.xpose.msra.mxu0 0.0
    %2074 = vmatprep.subr.mxu0 0.0
    %2075 = vmatpush1.xpose.msra.mxu0 0.0
    %2076 = vmatprep.subr.mxu0 0.0
    %2077 = vmatpush1.xpose.msra.mxu0 0.0
    %2078 = vmatprep.subr.mxu0 0.0
    %2079 = vmatpush1.xpose.msra.mxu0 0.0
    %2080 = vmatprep.subr.mxu0 0.0
    %2081 = vmatpush1.xpose.msra.mxu0 0.0
    %2082 = vmatprep.subr.mxu0 0.0
    %2083 = vmatpush1.xpose.msra.mxu0 0.0
    %2084 = vmatprep.subr.mxu0 0.0
    %2085 = vmatpush1.xpose.msra.mxu0 0.0
    %2086 = vmatprep.subr.mxu0 0.0
    %2087 = vmatpush1.xpose.msra.mxu0 0.0
    %2088 = vmatprep.subr.mxu0 0.0
    %2089 = vmatpush1.xpose.msra.mxu0 0.0
    %2090 = vmatprep.subr.mxu0 0.0
    %2091 = vmatpush1.xpose.msra.mxu0 0.0
    %2092 = vmatprep.subr.mxu0 0.0
    %2093 = vmatpush1.xpose.msra.mxu0 0.0
    %2094 = vmatprep.subr.mxu0 0.0
    %2095 = vmatpush1.xpose.msra.mxu0 0.0
    %2096 = vmatprep.subr.mxu0 0.0
    %2097 = vmatpush1.xpose.msra.mxu0 0.0
    %2098 = vmatprep.subr.mxu0 0.0
    %2099 = vmatpush1.xpose.msra.mxu0 0.0
    %2100 = vmatprep.subr.mxu0 0.0
    %2101 = vmatpush1.xpose.msra.mxu0 0.0
    %2102 = vmatprep.subr.mxu0 0.0
    %2103 = vmatpush1.xpose.msra.mxu0 0.0
    %2104 = vmatprep.subr.mxu0 0.0
    %2105 = vmatpush1.xpose.msra.mxu0 0.0
    %2106 = vmatprep.subr.mxu0 0.0
    %2107 = vmatpush1.xpose.msra.mxu0 0.0
    %2108 = vmatprep.subr.mxu0 0.0
    %2109 = vmatpush1.xpose.msra.mxu0 0.0
    %2110 = vmatprep.subr.mxu0 0.0
    %2111 = vmatpush1.xpose.msra.mxu0 0.0
    %2112 = vmatprep.subr.mxu0 0.0
    %2113 = vmatpush1.xpose.msra.mxu0 0.0
    %2114 = vmatprep.subr.mxu0 0.0
    %2115 = vmatpush1.xpose.msra.mxu0 0.0
    %2116 = vmatprep.subr.mxu0 0.0
    %2117 = vmatpush1.xpose.msra.mxu0 0.0
    %2118 = vmatprep.subr.mxu0 0.0
    %2119 = vmatpush1.xpose.msra.mxu0 0.0
    %2120 = vmatprep.subr.mxu0 0.0
    %2121 = vmatpush1.xpose.msra.mxu0 0.0
    %2122 = vmatprep.subr.mxu0 0.0
    %2123 = vmatpush1.xpose.msra.mxu0 0.0
    %2124 = vmatprep.subr.mxu0 0.0
    %2125 = vmatpush1.xpose.msra.mxu0 0.0
    %2126 = vmatprep.subr.mxu0 0.0
    %2127 = vmatpush1.xpose.msra.mxu0 0.0
    %2128 = vmatprep.subr.mxu0 0.0
    %2129 = vmatpush1.xpose.msra.mxu0 0.0
    %2130 = vmatprep.subr.mxu0 0.0
    %2131 = vmatpush1.xpose.msra.mxu0 0.0
    %2132 = vmatprep.mubr.f32.mxu0 %v268
    %2133 = vmatmul.mubr.f32.gmra.mrb[0].mxu0 %v266
    %v2134 = vpop.f32.mrb[0].mxu0
    %v2135 = vadd.f32 %v2065, %v2134
    %v2136 = vpop.f32.mrb[0].mxu0
    %2137 = vdwg.mxu0
    %2138 = vmatprep.subr.mxu0 %v548
    %2139 = vmatpush1.xpose.msra.mxu0 %v540
    %2140 = vmatprep.subr.mxu0 0.0
    %2141 = vmatpush1.xpose.msra.mxu0 0.0
    %2142 = vmatprep.subr.mxu0 0.0
    %2143 = vmatpush1.xpose.msra.mxu0 0.0
    %2144 = vmatprep.subr.mxu0 0.0
    %2145 = vmatpush1.xpose.msra.mxu0 0.0
    %2146 = vmatprep.subr.mxu0 0.0
    %2147 = vmatpush1.xpose.msra.mxu0 0.0
    %2148 = vmatprep.subr.mxu0 0.0
    %2149 = vmatpush1.xpose.msra.mxu0 0.0
    %2150 = vmatprep.subr.mxu0 0.0
    %2151 = vmatpush1.xpose.msra.mxu0 0.0
    %2152 = vmatprep.subr.mxu0 0.0
    %2153 = vmatpush1.xpose.msra.mxu0 0.0
    %2154 = vmatprep.subr.mxu0 0.0
    %2155 = vmatpush1.xpose.msra.mxu0 0.0
    %2156 = vmatprep.subr.mxu0 0.0
    %2157 = vmatpush1.xpose.msra.mxu0 0.0
    %2158 = vmatprep.subr.mxu0 0.0
    %2159 = vmatpush1.xpose.msra.mxu0 0.0
    %2160 = vmatprep.subr.mxu0 0.0
    %2161 = vmatpush1.xpose.msra.mxu0 0.0
    %2162 = vmatprep.subr.mxu0 0.0
    %2163 = vmatpush1.xpose.msra.mxu0 0.0
    %2164 = vmatprep.subr.mxu0 0.0
    %2165 = vmatpush1.xpose.msra.mxu0 0.0
    %2166 = vmatprep.subr.mxu0 0.0
    %2167 = vmatpush1.xpose.msra.mxu0 0.0
    %2168 = vmatprep.subr.mxu0 0.0
    %2169 = vmatpush1.xpose.msra.mxu0 0.0
    %2170 = vmatprep.subr.mxu0 0.0
    %2171 = vmatpush1.xpose.msra.mxu0 0.0
    %2172 = vmatprep.subr.mxu0 0.0
    %2173 = vmatpush1.xpose.msra.mxu0 0.0
    %2174 = vmatprep.subr.mxu0 0.0
    %2175 = vmatpush1.xpose.msra.mxu0 0.0
    %2176 = vmatprep.subr.mxu0 0.0
    %2177 = vmatpush1.xpose.msra.mxu0 0.0
    %2178 = vmatprep.subr.mxu0 0.0
    %2179 = vmatpush1.xpose.msra.mxu0 0.0
    %2180 = vmatprep.subr.mxu0 0.0
    %2181 = vmatpush1.xpose.msra.mxu0 0.0
    %2182 = vmatprep.subr.mxu0 0.0
    %2183 = vmatpush1.xpose.msra.mxu0 0.0
    %2184 = vmatprep.subr.mxu0 0.0
    %2185 = vmatpush1.xpose.msra.mxu0 0.0
    %2186 = vmatprep.subr.mxu0 0.0
    %2187 = vmatpush1.xpose.msra.mxu0 0.0
    %2188 = vmatprep.subr.mxu0 0.0
    %2189 = vmatpush1.xpose.msra.mxu0 0.0
    %2190 = vmatprep.subr.mxu0 0.0
    %2191 = vmatpush1.xpose.msra.mxu0 0.0
    %2192 = vmatprep.subr.mxu0 0.0
    %2193 = vmatpush1.xpose.msra.mxu0 0.0
    %2194 = vmatprep.subr.mxu0 0.0
    %2195 = vmatpush1.xpose.msra.mxu0 0.0
    %2196 = vmatprep.subr.mxu0 0.0
    %2197 = vmatpush1.xpose.msra.mxu0 0.0
    %2198 = vmatprep.subr.mxu0 0.0
    %2199 = vmatpush1.xpose.msra.mxu0 0.0
    %2200 = vmatprep.subr.mxu0 0.0
    %2201 = vmatpush1.xpose.msra.mxu0 0.0
    %2202 = vmatprep.mubr.f32.mxu0 %v284
    %2203 = vmatmul.mubr.f32.gmra.mrb[0].mxu0 %v276
    %v2204 = vpop.f32.mrb[0].mxu0
    %v2205 = vadd.f32 %v2135, %v2204
    %v2206 = vpop.f32.mrb[0].mxu0
    %2207 = vdwg.mxu0
    %2208 = vmatprep.subr.mxu0 %v549
    %2209 = vmatpush1.xpose.msra.mxu0 %v547
    %2210 = vmatprep.subr.mxu0 0.0
    %2211 = vmatpush1.xpose.msra.mxu0 0.0
    %2212 = vmatprep.subr.mxu0 0.0
    %2213 = vmatpush1.xpose.msra.mxu0 0.0
    %2214 = vmatprep.subr.mxu0 0.0
    %2215 = vmatpush1.xpose.msra.mxu0 0.0
    %2216 = vmatprep.subr.mxu0 0.0
    %2217 = vmatpush1.xpose.msra.mxu0 0.0
    %2218 = vmatprep.subr.mxu0 0.0
    %2219 = vmatpush1.xpose.msra.mxu0 0.0
    %2220 = vmatprep.subr.mxu0 0.0
    %2221 = vmatpush1.xpose.msra.mxu0 0.0
    %2222 = vmatprep.subr.mxu0 0.0
    %2223 = vmatpush1.xpose.msra.mxu0 0.0
    %2224 = vmatprep.subr.mxu0 0.0
    %2225 = vmatpush1.xpose.msra.mxu0 0.0
    %2226 = vmatprep.subr.mxu0 0.0
    %2227 = vmatpush1.xpose.msra.mxu0 0.0
    %2228 = vmatprep.subr.mxu0 0.0
    %2229 = vmatpush1.xpose.msra.mxu0 0.0
    %2230 = vmatprep.subr.mxu0 0.0
    %2231 = vmatpush1.xpose.msra.mxu0 0.0
    %2232 = vmatprep.subr.mxu0 0.0
    %2233 = vmatpush1.xpose.msra.mxu0 0.0
    %2234 = vmatprep.subr.mxu0 0.0
    %2235 = vmatpush1.xpose.msra.mxu0 0.0
    %2236 = vmatprep.subr.mxu0 0.0
    %2237 = vmatpush1.xpose.msra.mxu0 0.0
    %2238 = vmatprep.subr.mxu0 0.0
    %2239 = vmatpush1.xpose.msra.mxu0 0.0
    %2240 = vmatprep.subr.mxu0 0.0
    %2241 = vmatpush1.xpose.msra.mxu0 0.0
    %2242 = vmatprep.subr.mxu0 0.0
    %2243 = vmatpush1.xpose.msra.mxu0 0.0
    %2244 = vmatprep.subr.mxu0 0.0
    %2245 = vmatpush1.xpose.msra.mxu0 0.0
    %2246 = vmatprep.subr.mxu0 0.0
    %2247 = vmatpush1.xpose.msra.mxu0 0.0
    %2248 = vmatprep.subr.mxu0 0.0
    %2249 = vmatpush1.xpose.msra.mxu0 0.0
    %2250 = vmatprep.subr.mxu0 0.0
    %2251 = vmatpush1.xpose.msra.mxu0 0.0
    %2252 = vmatprep.subr.mxu0 0.0
    %2253 = vmatpush1.xpose.msra.mxu0 0.0
    %2254 = vmatprep.subr.mxu0 0.0
    %2255 = vmatpush1.xpose.msra.mxu0 0.0
    %2256 = vmatprep.subr.mxu0 0.0
    %2257 = vmatpush1.xpose.msra.mxu0 0.0
    %2258 = vmatprep.subr.mxu0 0.0
    %2259 = vmatpush1.xpose.msra.mxu0 0.0
    %2260 = vmatprep.subr.mxu0 0.0
    %2261 = vmatpush1.xpose.msra.mxu0 0.0
    %2262 = vmatprep.subr.mxu0 0.0
    %2263 = vmatpush1.xpose.msra.mxu0 0.0
    %2264 = vmatprep.subr.mxu0 0.0
    %2265 = vmatpush1.xpose.msra.mxu0 0.0
    %2266 = vmatprep.subr.mxu0 0.0
    %2267 = vmatpush1.xpose.msra.mxu0 0.0
    %2268 = vmatprep.subr.mxu0 0.0
    %2269 = vmatpush1.xpose.msra.mxu0 0.0
    %2270 = vmatprep.subr.mxu0 0.0
    %2271 = vmatpush1.xpose.msra.mxu0 0.0
    %2272 = vmatprep.mubr.f32.mxu0 %v285
    %2273 = vmatmul.mubr.f32.gmra.mrb[0].mxu0 %v283
    %v2274 = vpop.f32.mrb[0].mxu0
    %v2275 = vadd.f32 %v2205, %v2274
    %v2276 = vpop.f32.mrb[0].mxu0
    %2277 = vdwg.mxu0
    %vm2278 = vcmask 9216
    %2279 = vst.msk [vmem:[#allocation7] sm:$0x3] %vm2278, %v2275
    // Predicated region
    $region22: #{tpu_custom_call.1} parent=1 // pred_check
      _
    $region23: #{tpu_custom_call.1} parent=1 // pred_check_branch
      %2281 = sbr.rel (0) target = $region25
    $region24: #{tpu_custom_call.1} parent=1 // pred_region
      %s2283 = ssub.s32 32, 32
      %2284 = vsyncadd [#allocation4], %s2283
      %s2286 = sshll.u32 [#allocation7], 4
      %s2287 = int_to_ptr.vmem [resolvable:$true] %s2286
      %2289 = dma.vmem_to_hbm [thread:$0]  %s2287, 32, %s3, [#allocation4]
    $region25: #{tpu_custom_call.1} parent=1 // pred_fallthru
      _
    // Predicated region
    $region26: #{tpu_custom_call.1} parent=1 // pred_check
      _
    $region27: #{tpu_custom_call.1} parent=1 // pred_check_branch
      %2291 = sbr.rel (0) target = $region29
    $region28: #{tpu_custom_call.1} parent=1 // pred_region
      %2292 = dma.done [#allocation4], 32
    $region29: #{tpu_custom_call.1} parent=1 // pred_fallthru
      _
    %2293 = vsyncpa [#allocation3], 1
    %2294 = vsyncpa [#allocation6], 1
    %2295 = vsyncpa [#allocation4], 1

</llo_original>
